<compile_context>
chip_gen: v7x
topology: tpu7x:2x2x1
jax: 0.10.0
libtpu: 0.0.40
codegen_flags: <defaults>
</compile_context>

<pallas_src>
import functools

import jax
import jax.numpy as jnp
from jax import lax
from jax.experimental import pallas as pl
from jax.experimental.pallas import tpu as pltpu


# ---------------------------------------------------------------------------
# kernel
# ---------------------------------------------------------------------------
def _basic_block_kernel(*refs, n_phase, conv1_taps, sc_src, ch_pad):
    """Fused BasicBlock forward for one batch tile (NHWC layout).

    refs = (*phase_refs, w1_ref, s1_ref, b1_ref, w2_ref, s2_ref, b2_ref,
            out_ref, mid_ref)
      phase_refs : 1 (stride 1) or 4 (stride 2, parity phases) padded inputs
      w*_ref     : (9*Cin, Cout) bf16 tap-concatenated conv weights
      s*/b*_ref  : (1, Cout) f32 folded BatchNorm scale / bias
      out_ref    : (n, Ho, Wo, Cout) f32 output tile
      mid_ref    : (n, Ho+2, Wo+2, Cout) f32 VMEM scratch (padded conv1 output)
    """
    phase_refs = refs[:n_phase]
    (w1_ref, s1_ref, b1_ref, w2_ref, s2_ref, b2_ref,
     out_ref, mid_ref) = refs[n_phase:]

    n, ho, wo, cout = out_ref.shape
    m = n * ho * wo

    # ---- conv1 (stride folded into the phase decomposition) + BN1 + ReLU ----
    pieces = [phase_refs[p][:, dh:dh + ho, dw:dw + wo, :]
              for (p, dh, dw) in conv1_taps]
    patches = jnp.concatenate(pieces, axis=-1)               # (n,ho,wo,9*cin)
    patches = patches.reshape(m, patches.shape[-1]).astype(jnp.bfloat16)
    acc1 = jnp.dot(patches, w1_ref[...],                     # K = 9*cin
                   preferred_element_type=jnp.float32)
    y1 = jnp.maximum(acc1 * s1_ref[...] + b1_ref[...], 0.0)  # BN1 + ReLU (f32)
    y1 = y1.reshape(n, ho, wo, cout)

    # Stash conv1 output into a zero-padded VMEM scratch so conv2's 3x3 halo
    # reads are plain static slices (no HBM round trip of the intermediate).
    mid_ref[...] = jnp.zeros_like(mid_ref)
    mid_ref[:, 1:1 + ho, 1:1 + wo, :] = y1

    # ---- conv2 (stride 1) + BN2 ----
    pieces2 = [mid_ref[:, kh:kh + ho, kw:kw + wo, :]
               for kh in range(3) for kw in range(3)]
    patches2 = jnp.concatenate(pieces2, axis=-1)             # (n,ho,wo,9*cout)
    patches2 = patches2.reshape(m, patches2.shape[-1]).astype(jnp.bfloat16)
    acc2 = jnp.dot(patches2, w2_ref[...],                    # K = 9*cout
                   preferred_element_type=jnp.float32)
    y2 = (acc2 * s2_ref[...] + b2_ref[...]).reshape(n, ho, wo, cout)

    # ---- option-'A' shortcut (spatial subsample + zero-pad channels) ----
    p_idx, dh, dw = sc_src
    sc = phase_refs[p_idx][:, dh:dh + ho, dw:dw + wo, :].astype(jnp.float32)
    if ch_pad > 0:
        z = jnp.zeros((n, ho, wo, ch_pad), jnp.float32)
        sc = jnp.concatenate([z, sc, z], axis=-1)

    out_ref[...] = jnp.maximum(y2 + sc, 0.0).astype(out_ref.dtype)


# ---------------------------------------------------------------------------
# wrapper
# ---------------------------------------------------------------------------
def _tile_n_spec(shape):
    """Block over the leading (batch) axis, full extent everywhere else."""
    blk = (1,) + tuple(shape[1:])
    nrest = len(shape) - 1
    return pl.BlockSpec(blk, lambda i, nrest=nrest: (i,) + (0,) * nrest)


def _whole_spec(shape):
    nd = len(shape)
    return pl.BlockSpec(tuple(shape), lambda i, nd=nd: (0,) * nd)


def basic_block_forward(x_nchw, params, *, stride, planes):
    n, in_planes, h, w = x_nchw.shape
    assert h % stride == 0 and w % stride == 0
    ho, wo = h // stride, w // stride

    x = jnp.transpose(x_nchw, (0, 2, 3, 1)).astype(jnp.float32)   # NHWC
    xp = jnp.pad(x, ((0, 0), (1, 1), (1, 1), (0, 0)))

    if stride == 1:
        phases = [xp]
        conv1_taps = tuple((0, kh, kw) for kh in range(3) for kw in range(3))
        sc_src = (0, 1, 1)                  # interior of xp == x
    else:
        assert stride == 2, "CIFAR BasicBlock only uses stride 1 or 2"
        # Space-to-depth parity phases of the padded input: phase (r,c) holds
        # xp[:, r::2, c::2, :].  Every stride-2 tap then reads a contiguous
        # (Ho, Wo) window of one phase -> direct strided conv, no wasted work.
        phases = [xp[:, r::2, c::2, :] for r in range(2) for c in range(2)]
        conv1_taps = tuple(((kh % 2) * 2 + (kw % 2), kh // 2, kw // 2)
                           for kh in range(3) for kw in range(3))
        sc_src = (3, 0, 0)                  # x[:, ::2, ::2, :] == phase(1,1)

    if stride != 1 or in_planes != planes:
        ch_pad = planes // 4
        assert in_planes + 2 * ch_pad == planes, "option-'A' shortcut mismatch"
    else:
        ch_pad = 0

    s1 = params["scale1"].reshape(1, planes).astype(jnp.float32)
    b1 = params["bias1"].reshape(1, planes).astype(jnp.float32)
    s2 = params["scale2"].reshape(1, planes).astype(jnp.float32)
    b2 = params["bias2"].reshape(1, planes).astype(jnp.float32)
    w1m = params["w1_mat"]                  # (9*in_planes, planes) bf16
    w2m = params["w2_mat"]                  # (9*planes,    planes) bf16

    inputs = list(phases) + [w1m, s1, b1, w2m, s2, b2]
    in_specs = [_tile_n_spec(p.shape) for p in phases] + [
        _whole_spec(w1m.shape), _whole_spec(s1.shape), _whole_spec(b1.shape),
        _whole_spec(w2m.shape), _whole_spec(s2.shape), _whole_spec(b2.shape)]

    out_shape = jax.ShapeDtypeStruct((n, ho, wo, planes), jnp.float32)
    kernel = functools.partial(
        _basic_block_kernel, n_phase=len(phases), conv1_taps=conv1_taps,
        sc_src=sc_src, ch_pad=ch_pad)

    out = pl.pallas_call(
        kernel,
        out_shape=out_shape,
        grid_spec=pltpu.PrefetchScalarGridSpec(
            num_scalar_prefetch=0,
            grid=(n,),                                    # one image per step
            in_specs=in_specs,
            out_specs=_tile_n_spec(out_shape.shape),
            scratch_shapes=[pltpu.VMEM((1, ho + 2, wo + 2, planes),
                                       jnp.float32)]),
        compiler_params=pltpu.CompilerParams(
            dimension_semantics=("parallel",),            # megacore on v7x
            vmem_limit_bytes=48 * 1024 * 1024),
    )(*inputs)
    return jnp.transpose(out, (0, 3, 1, 2))               # back to NCHW


# ---------------------------------------------------------------------------
# params / reference
# ---------------------------------------------------------------------------
def _fold_bn(gamma, beta, mean, var, eps=1e-5):
    scale = gamma / jnp.sqrt(var + eps)
    bias = beta - mean * scale
    return scale, bias


def init_params(key, in_planes, planes):
    ks = jax.random.split(key, 10)
    w1 = 0.1 * jax.random.normal(ks[0], (planes, in_planes, 3, 3), jnp.float32)  # OIHW
    w2 = 0.1 * jax.random.normal(ks[1], (planes, planes, 3, 3), jnp.float32)     # OIHW
    g1 = 1.0 + 0.1 * jax.random.normal(ks[2], (planes,), jnp.float32)
    b1 = 0.1 * jax.random.normal(ks[3], (planes,), jnp.float32)
    m1 = 0.1 * jax.random.normal(ks[4], (planes,), jnp.float32)
    v1 = jax.random.uniform(ks[5], (planes,), jnp.float32, 0.5, 1.5)
    g2 = 1.0 + 0.1 * jax.random.normal(ks[6], (planes,), jnp.float32)
    b2 = 0.1 * jax.random.normal(ks[7], (planes,), jnp.float32)
    m2 = 0.1 * jax.random.normal(ks[8], (planes,), jnp.float32)
    v2 = jax.random.uniform(ks[9], (planes,), jnp.float32, 0.5, 1.5)
    scale1, bias1 = _fold_bn(g1, b1, m1, v1)
    scale2, bias2 = _fold_bn(g2, b2, m2, v2)
    # OIHW -> tap-concatenated (9*Cin, Cout) matrices, bf16 for the MXU.
    # Row index is (kh*3 + kw)*Cin + cin, matching the kernel's patch concat.
    w1_mat = jnp.transpose(w1, (2, 3, 1, 0)).reshape(9 * in_planes, planes)
    w2_mat = jnp.transpose(w2, (2, 3, 1, 0)).reshape(9 * planes, planes)
    return dict(w1=w1, w2=w2,
                w1_mat=w1_mat.astype(jnp.bfloat16),
                w2_mat=w2_mat.astype(jnp.bfloat16),
                scale1=scale1, bias1=bias1, scale2=scale2, bias2=bias2)


def reference_forward(x, p, *, stride, planes):
    """Pure-JAX (XLA, f32) reference of the same forward, NCHW like PyTorch."""
    def conv(x, w, s):
        return lax.conv_general_dilated(
            x, w, (s, s), ((1, 1), (1, 1)),
            dimension_numbers=("NCHW", "OIHW", "NCHW"))

    def bn(x, scale, bias):
        return x * scale[None, :, None, None] + bias[None, :, None, None]

    in_planes = x.shape[1]
    out = jax.nn.relu(bn(conv(x, p["w1"], stride), p["scale1"], p["bias1"]))
    out = bn(conv(out, p["w2"], 1), p["scale2"], p["bias2"])
    if stride != 1 or in_planes != planes:
        pad = planes // 4
        sc = jnp.pad(x[:, :, ::stride, ::stride],
                     ((0, 0), (pad, pad), (0, 0), (0, 0)))
    else:
        sc = x
    return jax.nn.relu(out + sc)


if __name__ == "__main__":
    key = jax.random.PRNGKey(0)

    # config A: downsampling block (stride 2, option-'A' shortcut)
    # config B: identity block (stride 1, in_planes == planes)
    for (N, in_planes, planes, H, W, stride) in [(2, 4, 8, 16, 16, 2),
                                                 (2, 8, 8, 16, 16, 1)]:
        kx, kp, key = jax.random.split(key, 3)
        x = jax.random.normal(kx, (N, in_planes, H, W), jnp.float32)
        params = init_params(kp, in_planes, planes)

        out = basic_block_forward(x, params, stride=stride, planes=planes)
        out = jax.block_until_ready(out)
        ref = reference_forward(x, params, stride=stride, planes=planes)

        assert out.shape == (N, planes, H // stride, W // stride), out.shape
        max_err = float(jnp.max(jnp.abs(out - ref)))
        # Tolerance deliberately loosened vs f32 because the MXU operands are
        # bf16 (accumulation and epilogue stay f32).
        assert jnp.allclose(out, ref, atol=5e-2, rtol=5e-2), max_err

    print("KERNEL_OK")
</pallas_src>

<mosaic_0001>
module attributes {stable_mosaic.version = 11 : i64} {
  func.func @_basic_block_kernel(%arg0: i32, %arg1: memref<1x9x9x4xf32, #tpu.memory_space<vmem>>, %arg2: memref<1x9x9x4xf32, #tpu.memory_space<vmem>>, %arg3: memref<1x9x9x4xf32, #tpu.memory_space<vmem>>, %arg4: memref<1x9x9x4xf32, #tpu.memory_space<vmem>>, %arg5: memref<36x8xbf16, #tpu.memory_space<vmem>>, %arg6: memref<1x8xf32, #tpu.memory_space<vmem>>, %arg7: memref<1x8xf32, #tpu.memory_space<vmem>>, %arg8: memref<72x8xbf16, #tpu.memory_space<vmem>>, %arg9: memref<1x8xf32, #tpu.memory_space<vmem>>, %arg10: memref<1x8xf32, #tpu.memory_space<vmem>>, %arg11: memref<1x8x8x8xf32, #tpu.memory_space<vmem>>, %arg12: memref<1x10x10x8xf32, #tpu.memory_space<vmem>>) attributes {dimension_semantics = [#tpu.dimension_semantics<parallel>], iteration_bounds = array<i64: 2>, scalar_prefetch = 0 : i64, scratch_operands = 1 : i64, tpu.core_type = #tpu.core_type<tc>, window_params = [{transform_indices = @transform_0, window_bounds = array<i64: 1, 9, 9, 4>}, {transform_indices = @transform_1, window_bounds = array<i64: 1, 9, 9, 4>}, {transform_indices = @transform_2, window_bounds = array<i64: 1, 9, 9, 4>}, {transform_indices = @transform_3, window_bounds = array<i64: 1, 9, 9, 4>}, {pipeline_mode = #tpu.pipeline_mode<synchronous>, transform_indices = @transform_4, window_bounds = array<i64: 36, 8>}, {pipeline_mode = #tpu.pipeline_mode<synchronous>, transform_indices = @transform_5, window_bounds = array<i64: 1, 8>}, {pipeline_mode = #tpu.pipeline_mode<synchronous>, transform_indices = @transform_6, window_bounds = array<i64: 1, 8>}, {pipeline_mode = #tpu.pipeline_mode<synchronous>, transform_indices = @transform_7, window_bounds = array<i64: 72, 8>}, {pipeline_mode = #tpu.pipeline_mode<synchronous>, transform_indices = @transform_8, window_bounds = array<i64: 1, 8>}, {pipeline_mode = #tpu.pipeline_mode<synchronous>, transform_indices = @transform_9, window_bounds = array<i64: 1, 8>}, {transform_indices = @transform_10, window_bounds = array<i64: 1, 8, 8, 8>}]} {
    %c0 = arith.constant 0 : index
    %c0_0 = arith.constant 0 : index
    %c0_1 = arith.constant 0 : index
    %c0_2 = arith.constant 0 : index
    %0 = vector.load %arg1[%c0, %c0_0, %c0_1, %c0_2] : memref<1x9x9x4xf32, #tpu.memory_space<vmem>>, vector<1x8x8x4xf32>
    %c0_3 = arith.constant 0 : index
    %c0_4 = arith.constant 0 : index
    %c0_5 = arith.constant 0 : index
    %c0_6 = arith.constant 0 : index
    %1 = vector.load %arg2[%c0_3, %c0_4, %c0_5, %c0_6] : memref<1x9x9x4xf32, #tpu.memory_space<vmem>>, vector<1x8x8x4xf32>
    %c0_7 = arith.constant 0 : index
    %c0_8 = arith.constant 0 : index
    %c1 = arith.constant 1 : index
    %c0_9 = arith.constant 0 : index
    %2 = vector.load %arg1[%c0_7, %c0_8, %c1, %c0_9] : memref<1x9x9x4xf32, #tpu.memory_space<vmem>>, vector<1x8x8x4xf32>
    %c0_10 = arith.constant 0 : index
    %c0_11 = arith.constant 0 : index
    %c0_12 = arith.constant 0 : index
    %c0_13 = arith.constant 0 : index
    %3 = vector.load %arg3[%c0_10, %c0_11, %c0_12, %c0_13] : memref<1x9x9x4xf32, #tpu.memory_space<vmem>>, vector<1x8x8x4xf32>
    %c0_14 = arith.constant 0 : index
    %c0_15 = arith.constant 0 : index
    %c0_16 = arith.constant 0 : index
    %c0_17 = arith.constant 0 : index
    %4 = vector.load %arg4[%c0_14, %c0_15, %c0_16, %c0_17] : memref<1x9x9x4xf32, #tpu.memory_space<vmem>>, vector<1x8x8x4xf32>
    %c0_18 = arith.constant 0 : index
    %c0_19 = arith.constant 0 : index
    %c1_20 = arith.constant 1 : index
    %c0_21 = arith.constant 0 : index
    %5 = vector.load %arg3[%c0_18, %c0_19, %c1_20, %c0_21] : memref<1x9x9x4xf32, #tpu.memory_space<vmem>>, vector<1x8x8x4xf32>
    %c0_22 = arith.constant 0 : index
    %c1_23 = arith.constant 1 : index
    %c0_24 = arith.constant 0 : index
    %c0_25 = arith.constant 0 : index
    %6 = vector.load %arg1[%c0_22, %c1_23, %c0_24, %c0_25] : memref<1x9x9x4xf32, #tpu.memory_space<vmem>>, vector<1x8x8x4xf32>
    %c0_26 = arith.constant 0 : index
    %c1_27 = arith.constant 1 : index
    %c0_28 = arith.constant 0 : index
    %c0_29 = arith.constant 0 : index
    %7 = vector.load %arg2[%c0_26, %c1_27, %c0_28, %c0_29] : memref<1x9x9x4xf32, #tpu.memory_space<vmem>>, vector<1x8x8x4xf32>
    %c0_30 = arith.constant 0 : index
    %c1_31 = arith.constant 1 : index
    %c1_32 = arith.constant 1 : index
    %c0_33 = arith.constant 0 : index
    %8 = vector.load %arg1[%c0_30, %c1_31, %c1_32, %c0_33] : memref<1x9x9x4xf32, #tpu.memory_space<vmem>>, vector<1x8x8x4xf32>
    %9 = tpu.concatenate %0, %1, %2, %3, %4, %5, %6, %7, %8 in 3 : vector<1x8x8x4xf32>, vector<1x8x8x4xf32>, vector<1x8x8x4xf32>, vector<1x8x8x4xf32>, vector<1x8x8x4xf32>, vector<1x8x8x4xf32>, vector<1x8x8x4xf32>, vector<1x8x8x4xf32>, vector<1x8x8x4xf32> -> vector<1x8x8x36xf32>
    %10 = vector.shape_cast %9 : vector<1x8x8x36xf32> to vector<64x36xf32>
    %11 = arith.truncf %10 : vector<64x36xf32> to vector<64x36xbf16>
    %c0_34 = arith.constant 0 : index
    %c0_35 = arith.constant 0 : index
    %12 = vector.load %arg5[%c0_34, %c0_35] : memref<36x8xbf16, #tpu.memory_space<vmem>>, vector<36x8xbf16>
    %cst = arith.constant dense<0.000000e+00> : vector<64x8xf32>
    %13 = tpu.matmul %11, %12, %cst {dimension_numbers = #tpu.dot_dimension_numbers<[1], [0], [0], [1], [0, 0, 1, 1], [], []>} : vector<64x36xbf16>, vector<36x8xbf16>, vector<64x8xf32> -> vector<64x8xf32>
    %c0_36 = arith.constant 0 : index
    %c0_37 = arith.constant 0 : index
    %14 = vector.load %arg6[%c0_36, %c0_37] : memref<1x8xf32, #tpu.memory_space<vmem>>, vector<1x8xf32>
    %15 = vector.broadcast %14 : vector<1x8xf32> to vector<64x8xf32>
    %16 = arith.mulf %13, %15 : vector<64x8xf32>
    %c0_38 = arith.constant 0 : index
    %c0_39 = arith.constant 0 : index
    %17 = vector.load %arg7[%c0_38, %c0_39] : memref<1x8xf32, #tpu.memory_space<vmem>>, vector<1x8xf32>
    %18 = vector.broadcast %17 : vector<1x8xf32> to vector<64x8xf32>
    %19 = arith.addf %16, %18 : vector<64x8xf32>
    %cst_40 = arith.constant 0.000000e+00 : f32
    %20 = vector.broadcast %cst_40 : f32 to vector<64x8xf32>
    %21 = arith.maximumf %19, %20 : vector<64x8xf32>
    %22 = vector.shape_cast %21 : vector<64x8xf32> to vector<1x8x8x8xf32>
    %cst_41 = arith.constant 0.000000e+00 : f32
    %23 = vector.broadcast %cst_41 : f32 to vector<1x10x10x8xf32>
    %c0_42 = arith.constant 0 : index
    %c0_43 = arith.constant 0 : index
    %c0_44 = arith.constant 0 : index
    %c0_45 = arith.constant 0 : index
    %24 = vector.load %arg12[%c0_42, %c0_43, %c0_44, %c0_45] : memref<1x10x10x8xf32, #tpu.memory_space<vmem>>, vector<1x10x10x8xf32>
    tpu.vector_store %arg12[%c0_42, %c0_43, %c0_44, %c0_45], %23 {strides = array<i32>} : memref<1x10x10x8xf32, #tpu.memory_space<vmem>>, vector<1x10x10x8xf32>,
    %c0_46 = arith.constant 0 : index
    %c1_47 = arith.constant 1 : index
    %c1_48 = arith.constant 1 : index
    %c0_49 = arith.constant 0 : index
    %25 = vector.load %arg12[%c0_46, %c1_47, %c1_48, %c0_49] : memref<1x10x10x8xf32, #tpu.memory_space<vmem>>, vector<1x8x8x8xf32>
    tpu.vector_store %arg12[%c0_46, %c1_47, %c1_48, %c0_49], %22 {strides = array<i32>} : memref<1x10x10x8xf32, #tpu.memory_space<vmem>>, vector<1x8x8x8xf32>,
    %c0_50 = arith.constant 0 : index
    %c0_51 = arith.constant 0 : index
    %c0_52 = arith.constant 0 : index
    %c0_53 = arith.constant 0 : index
    %26 = vector.load %arg12[%c0_50, %c0_51, %c0_52, %c0_53] : memref<1x10x10x8xf32, #tpu.memory_space<vmem>>, vector<1x8x8x8xf32>
    %c0_54 = arith.constant 0 : index
    %c0_55 = arith.constant 0 : index
    %c1_56 = arith.constant 1 : index
    %c0_57 = arith.constant 0 : index
    %27 = vector.load %arg12[%c0_54, %c0_55, %c1_56, %c0_57] : memref<1x10x10x8xf32, #tpu.memory_space<vmem>>, vector<1x8x8x8xf32>
    %c0_58 = arith.constant 0 : index
    %c0_59 = arith.constant 0 : index
    %c2 = arith.constant 2 : index
    %c0_60 = arith.constant 0 : index
    %28 = vector.load %arg12[%c0_58, %c0_59, %c2, %c0_60] : memref<1x10x10x8xf32, #tpu.memory_space<vmem>>, vector<1x8x8x8xf32>
    %c0_61 = arith.constant 0 : index
    %c1_62 = arith.constant 1 : index
    %c0_63 = arith.constant 0 : index
    %c0_64 = arith.constant 0 : index
    %29 = vector.load %arg12[%c0_61, %c1_62, %c0_63, %c0_64] : memref<1x10x10x8xf32, #tpu.memory_space<vmem>>, vector<1x8x8x8xf32>
    %c0_65 = arith.constant 0 : index
    %c1_66 = arith.constant 1 : index
    %c1_67 = arith.constant 1 : index
    %c0_68 = arith.constant 0 : index
    %30 = vector.load %arg12[%c0_65, %c1_66, %c1_67, %c0_68] : memref<1x10x10x8xf32, #tpu.memory_space<vmem>>, vector<1x8x8x8xf32>
    %c0_69 = arith.constant 0 : index
    %c1_70 = arith.constant 1 : index
    %c2_71 = arith.constant 2 : index
    %c0_72 = arith.constant 0 : index
    %31 = vector.load %arg12[%c0_69, %c1_70, %c2_71, %c0_72] : memref<1x10x10x8xf32, #tpu.memory_space<vmem>>, vector<1x8x8x8xf32>
    %c0_73 = arith.constant 0 : index
    %c2_74 = arith.constant 2 : index
    %c0_75 = arith.constant 0 : index
    %c0_76 = arith.constant 0 : index
    %32 = vector.load %arg12[%c0_73, %c2_74, %c0_75, %c0_76] : memref<1x10x10x8xf32, #tpu.memory_space<vmem>>, vector<1x8x8x8xf32>
    %c0_77 = arith.constant 0 : index
    %c2_78 = arith.constant 2 : index
    %c1_79 = arith.constant 1 : index
    %c0_80 = arith.constant 0 : index
    %33 = vector.load %arg12[%c0_77, %c2_78, %c1_79, %c0_80] : memref<1x10x10x8xf32, #tpu.memory_space<vmem>>, vector<1x8x8x8xf32>
    %c0_81 = arith.constant 0 : index
    %c2_82 = arith.constant 2 : index
    %c2_83 = arith.constant 2 : index
    %c0_84 = arith.constant 0 : index
    %34 = vector.load %arg12[%c0_81, %c2_82, %c2_83, %c0_84] : memref<1x10x10x8xf32, #tpu.memory_space<vmem>>, vector<1x8x8x8xf32>
    %35 = tpu.concatenate %26, %27, %28, %29, %30, %31, %32, %33, %34 in 3 : vector<1x8x8x8xf32>, vector<1x8x8x8xf32>, vector<1x8x8x8xf32>, vector<1x8x8x8xf32>, vector<1x8x8x8xf32>, vector<1x8x8x8xf32>, vector<1x8x8x8xf32>, vector<1x8x8x8xf32>, vector<1x8x8x8xf32> -> vector<1x8x8x72xf32>
    %36 = vector.shape_cast %35 : vector<1x8x8x72xf32> to vector<64x72xf32>
    %37 = arith.truncf %36 : vector<64x72xf32> to vector<64x72xbf16>
    %c0_85 = arith.constant 0 : index
    %c0_86 = arith.constant 0 : index
    %38 = vector.load %arg8[%c0_85, %c0_86] : memref<72x8xbf16, #tpu.memory_space<vmem>>, vector<72x8xbf16>
    %cst_87 = arith.constant dense<0.000000e+00> : vector<64x8xf32>
    %39 = tpu.matmul %37, %38, %cst_87 {dimension_numbers = #tpu.dot_dimension_numbers<[1], [0], [0], [1], [0, 0, 1, 1], [], []>} : vector<64x72xbf16>, vector<72x8xbf16>, vector<64x8xf32> -> vector<64x8xf32>
    %c0_88 = arith.constant 0 : index
    %c0_89 = arith.constant 0 : index
    %40 = vector.load %arg9[%c0_88, %c0_89] : memref<1x8xf32, #tpu.memory_space<vmem>>, vector<1x8xf32>
    %41 = vector.broadcast %40 : vector<1x8xf32> to vector<64x8xf32>
    %42 = arith.mulf %39, %41 : vector<64x8xf32>
    %c0_90 = arith.constant 0 : index
    %c0_91 = arith.constant 0 : index
    %43 = vector.load %arg10[%c0_90, %c0_91] : memref<1x8xf32, #tpu.memory_space<vmem>>, vector<1x8xf32>
    %44 = vector.broadcast %43 : vector<1x8xf32> to vector<64x8xf32>
    %45 = arith.addf %42, %44 : vector<64x8xf32>
    %46 = vector.shape_cast %45 : vector<64x8xf32> to vector<1x8x8x8xf32>
    %c0_92 = arith.constant 0 : index
    %c0_93 = arith.constant 0 : index
    %c0_94 = arith.constant 0 : index
    %c0_95 = arith.constant 0 : index
    %47 = vector.load %arg4[%c0_92, %c0_93, %c0_94, %c0_95] : memref<1x9x9x4xf32, #tpu.memory_space<vmem>>, vector<1x8x8x4xf32>
    %cst_96 = arith.constant 0.000000e+00 : f32
    %48 = vector.broadcast %cst_96 : f32 to vector<1x8x8x2xf32>
    %49 = tpu.concatenate %48, %47, %48 in 3 : vector<1x8x8x2xf32>, vector<1x8x8x4xf32>, vector<1x8x8x2xf32> -> vector<1x8x8x8xf32>
    %50 = arith.addf %46, %49 : vector<1x8x8x8xf32>
    %cst_97 = arith.constant 0.000000e+00 : f32
    %51 = vector.broadcast %cst_97 : f32 to vector<1x8x8x8xf32>
    %52 = arith.maximumf %50, %51 : vector<1x8x8x8xf32>
    %c0_98 = arith.constant 0 : index
    %c0_99 = arith.constant 0 : index
    %c0_100 = arith.constant 0 : index
    %c0_101 = arith.constant 0 : index
    %53 = vector.load %arg11[%c0_98, %c0_99, %c0_100, %c0_101] : memref<1x8x8x8xf32, #tpu.memory_space<vmem>>, vector<1x8x8x8xf32>
    tpu.vector_store %arg11[%c0_98, %c0_99, %c0_100, %c0_101], %52 {strides = array<i32>} : memref<1x8x8x8xf32, #tpu.memory_space<vmem>>, vector<1x8x8x8xf32>,
    return
  }
  func.func @transform_0(%arg0: i32) -> (i32, i32, i32, i32) {
    %c0_i32 = arith.constant 0 : i32
    %c0_i32_0 = arith.constant 0 : i32
    %c0_i32_1 = arith.constant 0 : i32
    %c0_i32_2 = arith.constant 0 : i32
    return %arg0, %c0_i32, %c0_i32_0, %c0_i32_1 : i32, i32, i32, i32
  }
  func.func @transform_1(%arg0: i32) -> (i32, i32, i32, i32) {
    %c0_i32 = arith.constant 0 : i32
    %c0_i32_0 = arith.constant 0 : i32
    %c0_i32_1 = arith.constant 0 : i32
    %c0_i32_2 = arith.constant 0 : i32
    return %arg0, %c0_i32, %c0_i32_0, %c0_i32_1 : i32, i32, i32, i32
  }
  func.func @transform_2(%arg0: i32) -> (i32, i32, i32, i32) {
    %c0_i32 = arith.constant 0 : i32
    %c0_i32_0 = arith.constant 0 : i32
    %c0_i32_1 = arith.constant 0 : i32
    %c0_i32_2 = arith.constant 0 : i32
    return %arg0, %c0_i32, %c0_i32_0, %c0_i32_1 : i32, i32, i32, i32
  }
  func.func @transform_3(%arg0: i32) -> (i32, i32, i32, i32) {
    %c0_i32 = arith.constant 0 : i32
    %c0_i32_0 = arith.constant 0 : i32
    %c0_i32_1 = arith.constant 0 : i32
    %c0_i32_2 = arith.constant 0 : i32
    return %arg0, %c0_i32, %c0_i32_0, %c0_i32_1 : i32, i32, i32, i32
  }
  func.func @transform_4(%arg0: i32) -> (i32, i32) {
    %c0_i32 = arith.constant 0 : i32
    %c0_i32_0 = arith.constant 0 : i32
    %c0_i32_1 = arith.constant 0 : i32
    return %c0_i32, %c0_i32_0 : i32, i32
  }
  func.func @transform_5(%arg0: i32) -> (i32, i32) {
    %c0_i32 = arith.constant 0 : i32
    %c0_i32_0 = arith.constant 0 : i32
    %c0_i32_1 = arith.constant 0 : i32
    return %c0_i32, %c0_i32_0 : i32, i32
  }
  func.func @transform_6(%arg0: i32) -> (i32, i32) {
    %c0_i32 = arith.constant 0 : i32
    %c0_i32_0 = arith.constant 0 : i32
    %c0_i32_1 = arith.constant 0 : i32
    return %c0_i32, %c0_i32_0 : i32, i32
  }
  func.func @transform_7(%arg0: i32) -> (i32, i32) {
    %c0_i32 = arith.constant 0 : i32
    %c0_i32_0 = arith.constant 0 : i32
    %c0_i32_1 = arith.constant 0 : i32
    return %c0_i32, %c0_i32_0 : i32, i32
  }
  func.func @transform_8(%arg0: i32) -> (i32, i32) {
    %c0_i32 = arith.constant 0 : i32
    %c0_i32_0 = arith.constant 0 : i32
    %c0_i32_1 = arith.constant 0 : i32
    return %c0_i32, %c0_i32_0 : i32, i32
  }
  func.func @transform_9(%arg0: i32) -> (i32, i32) {
    %c0_i32 = arith.constant 0 : i32
    %c0_i32_0 = arith.constant 0 : i32
    %c0_i32_1 = arith.constant 0 : i32
    return %c0_i32, %c0_i32_0 : i32, i32
  }
  func.func @transform_10(%arg0: i32) -> (i32, i32, i32, i32) {
    %c0_i32 = arith.constant 0 : i32
    %c0_i32_0 = arith.constant 0 : i32
    %c0_i32_1 = arith.constant 0 : i32
    %c0_i32_2 = arith.constant 0 : i32
    return %arg0, %c0_i32, %c0_i32_0, %c0_i32_1 : i32, i32, i32, i32
  }
}

</mosaic_0001>

<llo_original>
// kernel: tpu_custom_call.1
$region0: #{tpu_custom_call.1}
  #allocation0 [shape = 'u32[]', space=smem, size = 0x4, offset = 0x4, fixed_abs, tag = 'smem constant byte address 0x4 - core index']
  #allocation1 [shape = 'u32[144,128]{1,0:T(1,128)}', space=vmem, size = 0x12000, scoped, tag = 'internal scratch']
  #allocation2 [shape = 'f32[1,10,10,8]{3,2,1,0:T(8,128)}', space=vmem, size = 0x14000, scoped, tag = 'scratch operand']
  %s0 = inlined_call_operand.vmem [shape: f32[2,9,9,4], index: 0, kind: input, shape index: {}]
  %s1 = inlined_call_operand.vmem [shape: f32[2,9,9,4], index: 1, kind: input, shape index: {}]
  %s2 = inlined_call_operand.vmem [shape: f32[2,9,9,4], index: 2, kind: input, shape index: {}]
  %s3 = inlined_call_operand.vmem [shape: f32[2,9,9,4], index: 3, kind: input, shape index: {}]
  %s4 = inlined_call_operand.vmem [shape: bf16[36,8], index: 4, kind: input, shape index: {}]
  %s5 = inlined_call_operand.vmem [shape: f32[1,8], index: 5, kind: input, shape index: {}]
  %s6 = inlined_call_operand.vmem [shape: f32[1,8], index: 6, kind: input, shape index: {}]
  %s7 = inlined_call_operand.vmem [shape: bf16[72,8], index: 7, kind: input, shape index: {}]
  %s8 = inlined_call_operand.vmem [shape: f32[1,8], index: 8, kind: input, shape index: {}]
  %s9 = inlined_call_operand.vmem [shape: f32[1,8], index: 9, kind: input, shape index: {}]
  %s10 = inlined_call_operand.hbm [shape: f32[2,8,8,8], index: 10, kind: output, shape index: {}]
  %s11 = sld [smem:[#allocation0]]
  $region73: #{tpu_custom_call.1} parent=0
    _
  %s13 = ssub.s32 1, %s11
  %s14 = scalar_select 0, %s13, %s11
  $region1: #{tpu_custom_call.1} parent=0
    #allocation3 [shape = 'u8[65536]{0}', space=vmem, size = 0x10000, scoped, tag = 'output window, operand 0']
    #allocation4 [shape = 's32[2]{0}', space=sflag, size = 0x8, scoped, tag = 'scoped memory for tpu_custom_call.1']
    %15 = vsyncpa [#allocation4], 0
    %s16 = scalar_lea.sflag [#allocation4], 1
    %17 = vsyncpa %s16, 0
    loop: start=0, step=1, limit=4
    $region2: #{tpu_custom_call.1} parent=1 // loop_pre_header
      _
    $region3: #{tpu_custom_call.1} parent=1 // loop_header
      %s19 = sphi 0, %s23
      %p20 = scmp.ge.s32.totalorder %s19, 4
      %s29 = sphi 0, %s31
      %s32 = sphi 0, %s29
      %s33 = sphi 0, %s32
      %s49 = sphi 0, %s33
      %s55 = sphi 0, %s57
      %s58 = sphi 0, %s55
      %s59 = sphi 0, %s58
      %s75 = sphi 0, %s59
      %s81 = sphi 0, %s83
      %s84 = sphi 0, %s81
      %s85 = sphi 0, %s84
      %s101 = sphi 0, %s85
      %s107 = sphi 0, %s109
      %s110 = sphi 0, %s107
      %s111 = sphi 0, %s110
      %s127 = sphi 0, %s111
      %s131 = sphi 0, %s131
      %s133 = sphi 0, %s131
      %s134 = sphi 0, %s133
      %s148 = sphi 0, %s134
      %s152 = sphi 0, %s152
      %s154 = sphi 0, %s152
      %s155 = sphi 0, %s154
      %s169 = sphi 0, %s155
      %s173 = sphi 0, %s173
      %s175 = sphi 0, %s173
      %s176 = sphi 0, %s175
      %s190 = sphi 0, %s176
      %s194 = sphi 0, %s194
      %s196 = sphi 0, %s194
      %s197 = sphi 0, %s196
      %s211 = sphi 0, %s197
      %s215 = sphi 0, %s215
      %s217 = sphi 0, %s215
      %s218 = sphi 0, %s217
      %s232 = sphi 0, %s218
      %s236 = sphi 0, %s236
      %s238 = sphi 0, %s236
      %s239 = sphi 0, %s238
      %s253 = sphi 0, %s239
      %s259 = sphi 0, %s261
      %s262 = sphi 0, %s259
      %s263 = sphi 0, %s262
      %s279 = sphi 0, %s263
    $region4: #{tpu_custom_call.1} parent=1 // loop_header_branch
      %22 = sbr.rel (%p20) target = $region8
    $region5: #{tpu_custom_call.1} parent=1 // loop_body
      %s24 = ssub.s32 %s19, 1
      %s25 = ssub.s32 %s19, 2
      %s26 = sadd.s32 %s19, 1
      %s27 = ssub.s32 %s19, %s26
      %p28 = scmp.eq.s32.totalorder %s27, 0
      %s30 = sadd.s32 %s29, 1
      %s31 = scalar_select %p28, %s29, %s30
      %p34 = pneg %p28
      %p35 = scmp.eq.s32.totalorder %s19, 1
      %p36 = por %p34, %p35
      %p37 = scmp.ne.s32.totalorder %s29, %s32
      %p38 = scmp.eq.s32.totalorder %s19, 0
      %p39 = por %p37, %p38
      %p40 = scmp.ne.s32.totalorder %s29, %s32
      %p41 = scmp.eq.s32.totalorder %s24, 1
      %p42 = por %p40, %p41
      %p43 = scmp.ne.s32.totalorder %s32, %s33
      %p44 = scmp.eq.s32.totalorder %s24, 0
      %p45 = por %p43, %p44
      %p46 = scmp.ne.s32.totalorder %s32, %s33
      %p47 = scmp.eq.s32.totalorder %s25, 1
      %p48 = por %p46, %p47
      %p50 = scmp.ne.s32.totalorder %s33, %s49
      %p51 = scmp.eq.s32.totalorder %s25, 0
      %p52 = por %p50, %p51
      %s53 = ssub.s32 %s19, %s26
      %p54 = scmp.eq.s32.totalorder %s53, 0
      %s56 = sadd.s32 %s55, 1
      %s57 = scalar_select %p54, %s55, %s56
      %p60 = pneg %p54
      %p61 = scmp.eq.s32.totalorder %s19, 1
      %p62 = por %p60, %p61
      %p63 = scmp.ne.s32.totalorder %s55, %s58
      %p64 = scmp.eq.s32.totalorder %s19, 0
      %p65 = por %p63, %p64
      %p66 = scmp.ne.s32.totalorder %s55, %s58
      %p67 = scmp.eq.s32.totalorder %s24, 1
      %p68 = por %p66, %p67
      %p69 = scmp.ne.s32.totalorder %s58, %s59
      %p70 = scmp.eq.s32.totalorder %s24, 0
      %p71 = por %p69, %p70
      %p72 = scmp.ne.s32.totalorder %s58, %s59
      %p73 = scmp.eq.s32.totalorder %s25, 1
      %p74 = por %p72, %p73
      %p76 = scmp.ne.s32.totalorder %s59, %s75
      %p77 = scmp.eq.s32.totalorder %s25, 0
      %p78 = por %p76, %p77
      %s79 = ssub.s32 %s19, %s26
      %p80 = scmp.eq.s32.totalorder %s79, 0
      %s82 = sadd.s32 %s81, 1
      %s83 = scalar_select %p80, %s81, %s82
      %p86 = pneg %p80
      %p87 = scmp.eq.s32.totalorder %s19, 1
      %p88 = por %p86, %p87
      %p89 = scmp.ne.s32.totalorder %s81, %s84
      %p90 = scmp.eq.s32.totalorder %s19, 0
      %p91 = por %p89, %p90
      %p92 = scmp.ne.s32.totalorder %s81, %s84
      %p93 = scmp.eq.s32.totalorder %s24, 1
      %p94 = por %p92, %p93
      %p95 = scmp.ne.s32.totalorder %s84, %s85
      %p96 = scmp.eq.s32.totalorder %s24, 0
      %p97 = por %p95, %p96
      %p98 = scmp.ne.s32.totalorder %s84, %s85
      %p99 = scmp.eq.s32.totalorder %s25, 1
      %p100 = por %p98, %p99
      %p102 = scmp.ne.s32.totalorder %s85, %s101
      %p103 = scmp.eq.s32.totalorder %s25, 0
      %p104 = por %p102, %p103
      %s105 = ssub.s32 %s19, %s26
      %p106 = scmp.eq.s32.totalorder %s105, 0
      %s108 = sadd.s32 %s107, 1
      %s109 = scalar_select %p106, %s107, %s108
      %p112 = pneg %p106
      %p113 = scmp.eq.s32.totalorder %s19, 1
      %p114 = por %p112, %p113
      %p115 = scmp.ne.s32.totalorder %s107, %s110
      %p116 = scmp.eq.s32.totalorder %s19, 0
      %p117 = por %p115, %p116
      %p118 = scmp.ne.s32.totalorder %s107, %s110
      %p119 = scmp.eq.s32.totalorder %s24, 1
      %p120 = por %p118, %p119
      %p121 = scmp.ne.s32.totalorder %s110, %s111
      %p122 = scmp.eq.s32.totalorder %s24, 0
      %p123 = por %p121, %p122
      %p124 = scmp.ne.s32.totalorder %s110, %s111
      %p125 = scmp.eq.s32.totalorder %s25, 1
      %p126 = por %p124, %p125
      %p128 = scmp.ne.s32.totalorder %s111, %s127
      %p129 = scmp.eq.s32.totalorder %s25, 0
      %p130 = por %p128, %p129
      %s132 = sadd.s32 %s131, 1
      %p135 = scmp.eq.s32.totalorder %s19, 1
      %p136 = scmp.ne.s32.totalorder %s131, %s133
      %p137 = scmp.eq.s32.totalorder %s19, 0
      %p138 = por %p136, %p137
      %p139 = scmp.ne.s32.totalorder %s131, %s133
      %p140 = scmp.eq.s32.totalorder %s24, 1
      %p141 = por %p139, %p140
      %p142 = scmp.ne.s32.totalorder %s133, %s134
      %p143 = scmp.eq.s32.totalorder %s24, 0
      %p144 = por %p142, %p143
      %p145 = scmp.ne.s32.totalorder %s133, %s134
      %p146 = scmp.eq.s32.totalorder %s25, 1
      %p147 = por %p145, %p146
      %p149 = scmp.ne.s32.totalorder %s134, %s148
      %p150 = scmp.eq.s32.totalorder %s25, 0
      %p151 = por %p149, %p150
      %s153 = sadd.s32 %s152, 1
      %p156 = scmp.eq.s32.totalorder %s19, 1
      %p157 = scmp.ne.s32.totalorder %s152, %s154
      %p158 = scmp.eq.s32.totalorder %s19, 0
      %p159 = por %p157, %p158
      %p160 = scmp.ne.s32.totalorder %s152, %s154
      %p161 = scmp.eq.s32.totalorder %s24, 1
      %p162 = por %p160, %p161
      %p163 = scmp.ne.s32.totalorder %s154, %s155
      %p164 = scmp.eq.s32.totalorder %s24, 0
      %p165 = por %p163, %p164
      %p166 = scmp.ne.s32.totalorder %s154, %s155
      %p167 = scmp.eq.s32.totalorder %s25, 1
      %p168 = por %p166, %p167
      %p170 = scmp.ne.s32.totalorder %s155, %s169
      %p171 = scmp.eq.s32.totalorder %s25, 0
      %p172 = por %p170, %p171
      %s174 = sadd.s32 %s173, 1
      %p177 = scmp.eq.s32.totalorder %s19, 1
      %p178 = scmp.ne.s32.totalorder %s173, %s175
      %p179 = scmp.eq.s32.totalorder %s19, 0
      %p180 = por %p178, %p179
      %p181 = scmp.ne.s32.totalorder %s173, %s175
      %p182 = scmp.eq.s32.totalorder %s24, 1
      %p183 = por %p181, %p182
      %p184 = scmp.ne.s32.totalorder %s175, %s176
      %p185 = scmp.eq.s32.totalorder %s24, 0
      %p186 = por %p184, %p185
      %p187 = scmp.ne.s32.totalorder %s175, %s176
      %p188 = scmp.eq.s32.totalorder %s25, 1
      %p189 = por %p187, %p188
      %p191 = scmp.ne.s32.totalorder %s176, %s190
      %p192 = scmp.eq.s32.totalorder %s25, 0
      %p193 = por %p191, %p192
      %s195 = sadd.s32 %s194, 1
      %p198 = scmp.eq.s32.totalorder %s19, 1
      %p199 = scmp.ne.s32.totalorder %s194, %s196
      %p200 = scmp.eq.s32.totalorder %s19, 0
      %p201 = por %p199, %p200
      %p202 = scmp.ne.s32.totalorder %s194, %s196
      %p203 = scmp.eq.s32.totalorder %s24, 1
      %p204 = por %p202, %p203
      %p205 = scmp.ne.s32.totalorder %s196, %s197
      %p206 = scmp.eq.s32.totalorder %s24, 0
      %p207 = por %p205, %p206
      %p208 = scmp.ne.s32.totalorder %s196, %s197
      %p209 = scmp.eq.s32.totalorder %s25, 1
      %p210 = por %p208, %p209
      %p212 = scmp.ne.s32.totalorder %s197, %s211
      %p213 = scmp.eq.s32.totalorder %s25, 0
      %p214 = por %p212, %p213
      %s216 = sadd.s32 %s215, 1
      %p219 = scmp.eq.s32.totalorder %s19, 1
      %p220 = scmp.ne.s32.totalorder %s215, %s217
      %p221 = scmp.eq.s32.totalorder %s19, 0
      %p222 = por %p220, %p221
      %p223 = scmp.ne.s32.totalorder %s215, %s217
      %p224 = scmp.eq.s32.totalorder %s24, 1
      %p225 = por %p223, %p224
      %p226 = scmp.ne.s32.totalorder %s217, %s218
      %p227 = scmp.eq.s32.totalorder %s24, 0
      %p228 = por %p226, %p227
      %p229 = scmp.ne.s32.totalorder %s217, %s218
      %p230 = scmp.eq.s32.totalorder %s25, 1
      %p231 = por %p229, %p230
      %p233 = scmp.ne.s32.totalorder %s218, %s232
      %p234 = scmp.eq.s32.totalorder %s25, 0
      %p235 = por %p233, %p234
      %s237 = sadd.s32 %s236, 1
      %p240 = scmp.eq.s32.totalorder %s19, 1
      %p241 = scmp.ne.s32.totalorder %s236, %s238
      %p242 = scmp.eq.s32.totalorder %s19, 0
      %p243 = por %p241, %p242
      %p244 = scmp.ne.s32.totalorder %s236, %s238
      %p245 = scmp.eq.s32.totalorder %s24, 1
      %p246 = por %p244, %p245
      %p247 = scmp.ne.s32.totalorder %s238, %s239
      %p248 = scmp.eq.s32.totalorder %s24, 0
      %p249 = por %p247, %p248
      %p250 = scmp.ne.s32.totalorder %s238, %s239
      %p251 = scmp.eq.s32.totalorder %s25, 1
      %p252 = por %p250, %p251
      %p254 = scmp.ne.s32.totalorder %s239, %s253
      %p255 = scmp.eq.s32.totalorder %s25, 0
      %p256 = por %p254, %p255
      %s257 = ssub.s32 %s19, %s26
      %p258 = scmp.eq.s32.totalorder %s257, 0
      %s260 = sadd.s32 %s259, 1
      %s261 = scalar_select %p258, %s259, %s260
      %p264 = pneg %p258
      %p265 = scmp.eq.s32.totalorder %s19, 1
      %p266 = por %p264, %p265
      %p267 = scmp.ne.s32.totalorder %s259, %s262
      %p268 = scmp.eq.s32.totalorder %s19, 0
      %p269 = por %p267, %p268
      %p270 = scmp.ne.s32.totalorder %s259, %s262
      %p271 = scmp.eq.s32.totalorder %s24, 1
      %p272 = por %p270, %p271
      %p273 = scmp.ne.s32.totalorder %s262, %s263
      %p274 = scmp.eq.s32.totalorder %s24, 0
      %p275 = por %p273, %p274
      %p276 = scmp.ne.s32.totalorder %s262, %s263
      %p277 = scmp.eq.s32.totalorder %s25, 1
      %p278 = por %p276, %p277
      %p280 = scmp.ne.s32.totalorder %s263, %s279
      %p281 = scmp.eq.s32.totalorder %s25, 0
      %p282 = por %p280, %p281
      %p283 = scmp.le.s32.totalorder 1, %s19
      %p284 = scmp.lt.s32.totalorder %s19, 3
      %p285 = pnand %p283, %p284
      %p286 = pneg %p285
      // Predicated region
      $region9: #{tpu_custom_call.1} parent=5 // pred_check
        _
      $region10: #{tpu_custom_call.1} parent=5 // pred_check_branch
        %288 = sbr.rel (%p285) target = $region12
      $region11: #{tpu_custom_call.1} parent=5 // pred_region
        %s289 = ssub.s32 %s19, 1
        // Predicated region
        $region13: #{tpu_custom_call.1} parent=11 // pred_check
          %p290 = pneg %p144
        $region14: #{tpu_custom_call.1} parent=11 // pred_check_branch
          %292 = sbr.rel (%p290) target = $region16
        $region15: #{tpu_custom_call.1} parent=11 // pred_region
          _
        $region16: #{tpu_custom_call.1} parent=11 // pred_fallthru
          _
        // Predicated region
        $region17: #{tpu_custom_call.1} parent=11 // pred_check
          %p293 = pneg %p165
        $region18: #{tpu_custom_call.1} parent=11 // pred_check_branch
          %295 = sbr.rel (%p293) target = $region20
        $region19: #{tpu_custom_call.1} parent=11 // pred_region
          _
        $region20: #{tpu_custom_call.1} parent=11 // pred_fallthru
          _
        // Predicated region
        $region21: #{tpu_custom_call.1} parent=11 // pred_check
          %p296 = pneg %p186
        $region22: #{tpu_custom_call.1} parent=11 // pred_check_branch
          %298 = sbr.rel (%p296) target = $region24
        $region23: #{tpu_custom_call.1} parent=11 // pred_region
          _
        $region24: #{tpu_custom_call.1} parent=11 // pred_fallthru
          _
        // Predicated region
        $region25: #{tpu_custom_call.1} parent=11 // pred_check
          %p299 = pneg %p207
        $region26: #{tpu_custom_call.1} parent=11 // pred_check_branch
          %301 = sbr.rel (%p299) target = $region28
        $region27: #{tpu_custom_call.1} parent=11 // pred_region
          _
        $region28: #{tpu_custom_call.1} parent=11 // pred_fallthru
          _
        // Predicated region
        $region29: #{tpu_custom_call.1} parent=11 // pred_check
          %p302 = pneg %p228
        $region30: #{tpu_custom_call.1} parent=11 // pred_check_branch
          %304 = sbr.rel (%p302) target = $region32
        $region31: #{tpu_custom_call.1} parent=11 // pred_region
          _
        $region32: #{tpu_custom_call.1} parent=11 // pred_fallthru
          _
        // Predicated region
        $region33: #{tpu_custom_call.1} parent=11 // pred_check
          %p305 = pneg %p249
        $region34: #{tpu_custom_call.1} parent=11 // pred_check_branch
          %307 = sbr.rel (%p305) target = $region36
        $region35: #{tpu_custom_call.1} parent=11 // pred_region
          _
        $region36: #{tpu_custom_call.1} parent=11 // pred_fallthru
          _
      $region12: #{tpu_custom_call.1} parent=5 // pred_fallthru
        _
      %p308 = scmp.lt.s32.totalorder %s19, 2
      // Predicated region
      $region37: #{tpu_custom_call.1} parent=5 // pred_check
        %p309 = pneg %p308
      $region38: #{tpu_custom_call.1} parent=5 // pred_check_branch
        %311 = sbr.rel (%p309) target = $region40
      $region39: #{tpu_custom_call.1} parent=5 // pred_region
        // Predicated region
        $region41: #{tpu_custom_call.1} parent=39 // pred_check
          %p312 = pneg %p39
        $region42: #{tpu_custom_call.1} parent=39 // pred_check_branch
          %314 = sbr.rel (%p312) target = $region44
        $region43: #{tpu_custom_call.1} parent=39 // pred_region
          %p315 = scmp.lt.s32.totalorder %s19, 1
          %s316 = scalar_select %p315, %s19, 1
          %s317 = smul.addr %s316, 18
          %s318 = smul.addr %s317, 8
          %s319 = scalar_lea.vmem %s0, %s318
        $region44: #{tpu_custom_call.1} parent=39 // pred_fallthru
          _
        // Predicated region
        $region45: #{tpu_custom_call.1} parent=39 // pred_check
          %p320 = pneg %p65
        $region46: #{tpu_custom_call.1} parent=39 // pred_check_branch
          %322 = sbr.rel (%p320) target = $region48
        $region47: #{tpu_custom_call.1} parent=39 // pred_region
          %p323 = scmp.lt.s32.totalorder %s19, 1
          %s324 = scalar_select %p323, %s19, 1
          %s325 = smul.addr %s324, 18
          %s326 = smul.addr %s325, 8
          %s327 = scalar_lea.vmem %s1, %s326
        $region48: #{tpu_custom_call.1} parent=39 // pred_fallthru
          _
        // Predicated region
        $region49: #{tpu_custom_call.1} parent=39 // pred_check
          %p328 = pneg %p91
        $region50: #{tpu_custom_call.1} parent=39 // pred_check_branch
          %330 = sbr.rel (%p328) target = $region52
        $region51: #{tpu_custom_call.1} parent=39 // pred_region
          %p331 = scmp.lt.s32.totalorder %s19, 1
          %s332 = scalar_select %p331, %s19, 1
          %s333 = smul.addr %s332, 18
          %s334 = smul.addr %s333, 8
          %s335 = scalar_lea.vmem %s2, %s334
        $region52: #{tpu_custom_call.1} parent=39 // pred_fallthru
          _
        // Predicated region
        $region53: #{tpu_custom_call.1} parent=39 // pred_check
          %p336 = pneg %p117
        $region54: #{tpu_custom_call.1} parent=39 // pred_check_branch
          %338 = sbr.rel (%p336) target = $region56
        $region55: #{tpu_custom_call.1} parent=39 // pred_region
          %p339 = scmp.lt.s32.totalorder %s19, 1
          %s340 = scalar_select %p339, %s19, 1
          %s341 = smul.addr %s340, 18
          %s342 = smul.addr %s341, 8
          %s343 = scalar_lea.vmem %s3, %s342
        $region56: #{tpu_custom_call.1} parent=39 // pred_fallthru
          _
      $region40: #{tpu_custom_call.1} parent=5 // pred_fallthru
        _
      %p344 = scmp.le.s32.totalorder 1, %s19
      %p345 = scmp.lt.s32.totalorder %s19, 3
      %p346 = pnand %p344, %p345
      %p347 = pneg %p346
      // Predicated region
      $region57: #{tpu_custom_call.1} parent=5 // pred_check
        _
      $region58: #{tpu_custom_call.1} parent=5 // pred_check_branch
        %349 = sbr.rel (%p346) target = $region60
      $region59: #{tpu_custom_call.1} parent=5 // pred_region
        %s350 = ssub.s32 %s19, 1
        %p351 = scmp.lt.s32.totalorder %s24, 1
        %s352 = scalar_select %p351, %s24, 1
        %s353 = smul.addr %s352, 18
        %s354 = smul.addr %s353, 8
        %s355 = scalar_lea.vmem %s0, %s354
        %p356 = pneg %p45
        %p357 = pneg %p42
        %p358 = scmp.lt.s32.totalorder %s24, 1
        %s359 = scalar_select %p358, %s24, 1
        %s360 = smul.addr %s359, 18
        %s361 = smul.addr %s360, 8
        %s362 = scalar_lea.vmem %s1, %s361
        %p363 = pneg %p71
        %p364 = pneg %p68
        %p365 = scmp.lt.s32.totalorder %s24, 1
        %s366 = scalar_select %p365, %s24, 1
        %s367 = smul.addr %s366, 18
        %s368 = smul.addr %s367, 8
        %s369 = scalar_lea.vmem %s2, %s368
        %p370 = pneg %p97
        %p371 = pneg %p94
        %p372 = scmp.lt.s32.totalorder %s24, 1
        %s373 = scalar_select %p372, %s24, 1
        %s374 = smul.addr %s373, 18
        %s375 = smul.addr %s374, 8
        %s376 = scalar_lea.vmem %s3, %s375
        %p377 = pneg %p123
        %p378 = pneg %p120
        %p379 = pneg %p144
        %p380 = pneg %p141
        %p381 = pneg %p165
        %p382 = pneg %p162
        %p383 = pneg %p186
        %p384 = pneg %p183
        %p385 = pneg %p207
        %p386 = pneg %p204
        %p387 = pneg %p228
        %p388 = pneg %p225
        %p389 = pneg %p249
        %p390 = pneg %p246
        %p391 = pneg %p275
        %p392 = pneg %p272
        %s393 = sand.u32 %s262, 1
        %s394 = scalar_lea.sflag [#allocation4], %s393
        %s395 = sand.u32 %s262, 1
        %s396 = smul.addr %s395, 64
        %s397 = scalar_lea.vmem [#allocation3], %s396
        %p398 = scmp.lt.s32.totalorder %s24, 1
        %s399 = scalar_select %p398, %s24, 1
        %s400 = smul.addr %s399, 18
        %s401 = smul.addr %s400, 8
        %s402 = scalar_lea.vmem %s0, %s401
        %p403 = scmp.lt.s32.totalorder %s24, 1
        %s404 = scalar_select %p403, %s24, 1
        %s405 = smul.addr %s404, 18
        %s406 = smul.addr %s405, 8
        %s407 = scalar_lea.vmem %s1, %s406
        %p408 = scmp.lt.s32.totalorder %s24, 1
        %s409 = scalar_select %p408, %s24, 1
        %s410 = smul.addr %s409, 18
        %s411 = smul.addr %s410, 8
        %s412 = scalar_lea.vmem %s2, %s411
        %p413 = scmp.lt.s32.totalorder %s24, 1
        %s414 = scalar_select %p413, %s24, 1
        %s415 = smul.addr %s414, 18
        %s416 = smul.addr %s415, 8
        %s417 = scalar_lea.vmem %s3, %s416
        %v419 = vld [vmem:[%s402] sm:$0xff]
        %v420 = vld [vmem:[%s402 + $0x10] sm:$0xff]
        %v421 = vld [vmem:[%s402 + $0x20] sm:$0xff]
        %v422 = vld [vmem:[%s402 + $0x30] sm:$0xff]
        %v423 = vld [vmem:[%s402 + $0x40] sm:$0xff]
        %v424 = vld [vmem:[%s402 + $0x50] sm:$0xff]
        %v425 = vld [vmem:[%s402 + $0x60] sm:$0xff]
        %v426 = vld [vmem:[%s402 + $0x70] sm:$0xff]
        %v427 = vld [vmem:[%s407] sm:$0xff]
        %v428 = vld [vmem:[%s407 + $0x10] sm:$0xff]
        %v429 = vld [vmem:[%s407 + $0x20] sm:$0xff]
        %v430 = vld [vmem:[%s407 + $0x30] sm:$0xff]
        %v431 = vld [vmem:[%s407 + $0x40] sm:$0xff]
        %v432 = vld [vmem:[%s407 + $0x50] sm:$0xff]
        %v433 = vld [vmem:[%s407 + $0x60] sm:$0xff]
        %v434 = vld [vmem:[%s407 + $0x70] sm:$0xff]
        %v435 = vld [vmem:[%s402 + $0x1] sm:$0xff]
        %v436 = vld [vmem:[%s402 + $0x11] sm:$0xff]
        %v437 = vld [vmem:[%s402 + $0x21] sm:$0xff]
        %v438 = vld [vmem:[%s402 + $0x31] sm:$0xff]
        %v439 = vld [vmem:[%s402 + $0x41] sm:$0xff]
        %v440 = vld [vmem:[%s402 + $0x51] sm:$0xff]
        %v441 = vld [vmem:[%s402 + $0x61] sm:$0xff]
        %v442 = vld [vmem:[%s402 + $0x71] sm:$0xff]
        %v443 = vld [vmem:[%s412] sm:$0xff]
        %v444 = vld [vmem:[%s412 + $0x10] sm:$0xff]
        %v445 = vld [vmem:[%s412 + $0x20] sm:$0xff]
        %v446 = vld [vmem:[%s412 + $0x30] sm:$0xff]
        %v447 = vld [vmem:[%s412 + $0x40] sm:$0xff]
        %v448 = vld [vmem:[%s412 + $0x50] sm:$0xff]
        %v449 = vld [vmem:[%s412 + $0x60] sm:$0xff]
        %v450 = vld [vmem:[%s412 + $0x70] sm:$0xff]
        %v451 = vld [vmem:[%s417] sm:$0xff]
        %v452 = vld [vmem:[%s417 + $0x10] sm:$0xff]
        %v453 = vld [vmem:[%s417 + $0x20] sm:$0xff]
        %v454 = vld [vmem:[%s417 + $0x30] sm:$0xff]
        %v455 = vld [vmem:[%s417 + $0x40] sm:$0xff]
        %v456 = vld [vmem:[%s417 + $0x50] sm:$0xff]
        %v457 = vld [vmem:[%s417 + $0x60] sm:$0xff]
        %v458 = vld [vmem:[%s417 + $0x70] sm:$0xff]
        %v459 = vld [vmem:[%s412 + $0x1] sm:$0xff]
        %v460 = vld [vmem:[%s412 + $0x11] sm:$0xff]
        %v461 = vld [vmem:[%s412 + $0x21] sm:$0xff]
        %v462 = vld [vmem:[%s412 + $0x31] sm:$0xff]
        %v463 = vld [vmem:[%s412 + $0x41] sm:$0xff]
        %v464 = vld [vmem:[%s412 + $0x51] sm:$0xff]
        %v465 = vld [vmem:[%s412 + $0x61] sm:$0xff]
        %v466 = vld [vmem:[%s412 + $0x71] sm:$0xff]
        %s467 = scalar_lea.vmem %s402, 16
        %v468 = vld [vmem:[%s467] sm:$0xff]
        %v469 = vld [vmem:[%s467 + $0x10] sm:$0xff]
        %v470 = vld [vmem:[%s467 + $0x20] sm:$0xff]
        %v471 = vld [vmem:[%s467 + $0x30] sm:$0xff]
        %v472 = vld [vmem:[%s467 + $0x40] sm:$0xff]
        %v473 = vld [vmem:[%s467 + $0x50] sm:$0xff]
        %v474 = vld [vmem:[%s467 + $0x60] sm:$0xff]
        %v475 = vld [vmem:[%s467 + $0x70] sm:$0xff]
        %s476 = scalar_lea.vmem %s407, 16
        %v477 = vld [vmem:[%s476] sm:$0xff]
        %v478 = vld [vmem:[%s476 + $0x10] sm:$0xff]
        %v479 = vld [vmem:[%s476 + $0x20] sm:$0xff]
        %v480 = vld [vmem:[%s476 + $0x30] sm:$0xff]
        %v481 = vld [vmem:[%s476 + $0x40] sm:$0xff]
        %v482 = vld [vmem:[%s476 + $0x50] sm:$0xff]
        %v483 = vld [vmem:[%s476 + $0x60] sm:$0xff]
        %v484 = vld [vmem:[%s476 + $0x70] sm:$0xff]
        %v485 = vld [vmem:[%s467 + $0x1] sm:$0xff]
        %v486 = vld [vmem:[%s467 + $0x11] sm:$0xff]
        %v487 = vld [vmem:[%s467 + $0x21] sm:$0xff]
        %v488 = vld [vmem:[%s467 + $0x31] sm:$0xff]
        %v489 = vld [vmem:[%s467 + $0x41] sm:$0xff]
        %v490 = vld [vmem:[%s467 + $0x51] sm:$0xff]
        %v491 = vld [vmem:[%s467 + $0x61] sm:$0xff]
        %v492 = vld [vmem:[%s467 + $0x71] sm:$0xff]
        %501 = vrot.lane.b32.xlu0 %v427, 4
        %v502 = vpop.permute.xlu0 %501
        %503 = vrot.lane.b32.xlu0 %v428, 4
        %v504 = vpop.permute.xlu0 %503
        %505 = vrot.lane.b32.xlu0 %v429, 4
        %v506 = vpop.permute.xlu0 %505
        %507 = vrot.lane.b32.xlu0 %v430, 4
        %v508 = vpop.permute.xlu0 %507
        %509 = vrot.lane.b32.xlu0 %v431, 4
        %v510 = vpop.permute.xlu0 %509
        %511 = vrot.lane.b32.xlu0 %v432, 4
        %v512 = vpop.permute.xlu0 %511
        %513 = vrot.lane.b32.xlu0 %v433, 4
        %v514 = vpop.permute.xlu0 %513
        %515 = vrot.lane.b32.xlu0 %v434, 4
        %v516 = vpop.permute.xlu0 %515
        %533 = vrot.lane.b32.xlu0 %v435, 8
        %v534 = vpop.permute.xlu0 %533
        %535 = vrot.lane.b32.xlu0 %v436, 8
        %v536 = vpop.permute.xlu0 %535
        %537 = vrot.lane.b32.xlu0 %v437, 8
        %v538 = vpop.permute.xlu0 %537
        %539 = vrot.lane.b32.xlu0 %v438, 8
        %v540 = vpop.permute.xlu0 %539
        %541 = vrot.lane.b32.xlu0 %v439, 8
        %v542 = vpop.permute.xlu0 %541
        %543 = vrot.lane.b32.xlu0 %v440, 8
        %v544 = vpop.permute.xlu0 %543
        %545 = vrot.lane.b32.xlu0 %v441, 8
        %v546 = vpop.permute.xlu0 %545
        %547 = vrot.lane.b32.xlu0 %v442, 8
        %v548 = vpop.permute.xlu0 %547
        %565 = vrot.lane.b32.xlu0 %v443, 12
        %v566 = vpop.permute.xlu0 %565
        %567 = vrot.lane.b32.xlu0 %v444, 12
        %v568 = vpop.permute.xlu0 %567
        %569 = vrot.lane.b32.xlu0 %v445, 12
        %v570 = vpop.permute.xlu0 %569
        %571 = vrot.lane.b32.xlu0 %v446, 12
        %v572 = vpop.permute.xlu0 %571
        %573 = vrot.lane.b32.xlu0 %v447, 12
        %v574 = vpop.permute.xlu0 %573
        %575 = vrot.lane.b32.xlu0 %v448, 12
        %v576 = vpop.permute.xlu0 %575
        %577 = vrot.lane.b32.xlu0 %v449, 12
        %v578 = vpop.permute.xlu0 %577
        %579 = vrot.lane.b32.xlu0 %v450, 12
        %v580 = vpop.permute.xlu0 %579
        %597 = vrot.lane.b32.xlu0 %v451, 16
        %v598 = vpop.permute.xlu0 %597
        %599 = vrot.lane.b32.xlu0 %v452, 16
        %v600 = vpop.permute.xlu0 %599
        %601 = vrot.lane.b32.xlu0 %v453, 16
        %v602 = vpop.permute.xlu0 %601
        %603 = vrot.lane.b32.xlu0 %v454, 16
        %v604 = vpop.permute.xlu0 %603
        %605 = vrot.lane.b32.xlu0 %v455, 16
        %v606 = vpop.permute.xlu0 %605
        %607 = vrot.lane.b32.xlu0 %v456, 16
        %v608 = vpop.permute.xlu0 %607
        %609 = vrot.lane.b32.xlu0 %v457, 16
        %v610 = vpop.permute.xlu0 %609
        %611 = vrot.lane.b32.xlu0 %v458, 16
        %v612 = vpop.permute.xlu0 %611
        %629 = vrot.lane.b32.xlu0 %v459, 20
        %v630 = vpop.permute.xlu0 %629
        %631 = vrot.lane.b32.xlu0 %v460, 20
        %v632 = vpop.permute.xlu0 %631
        %633 = vrot.lane.b32.xlu0 %v461, 20
        %v634 = vpop.permute.xlu0 %633
        %635 = vrot.lane.b32.xlu0 %v462, 20
        %v636 = vpop.permute.xlu0 %635
        %637 = vrot.lane.b32.xlu0 %v463, 20
        %v638 = vpop.permute.xlu0 %637
        %639 = vrot.lane.b32.xlu0 %v464, 20
        %v640 = vpop.permute.xlu0 %639
        %641 = vrot.lane.b32.xlu0 %v465, 20
        %v642 = vpop.permute.xlu0 %641
        %643 = vrot.lane.b32.xlu0 %v466, 20
        %v644 = vpop.permute.xlu0 %643
        %661 = vrot.lane.b32.xlu0 %v468, 24
        %v662 = vpop.permute.xlu0 %661
        %663 = vrot.lane.b32.xlu0 %v469, 24
        %v664 = vpop.permute.xlu0 %663
        %665 = vrot.lane.b32.xlu0 %v470, 24
        %v666 = vpop.permute.xlu0 %665
        %667 = vrot.lane.b32.xlu0 %v471, 24
        %v668 = vpop.permute.xlu0 %667
        %669 = vrot.lane.b32.xlu0 %v472, 24
        %v670 = vpop.permute.xlu0 %669
        %671 = vrot.lane.b32.xlu0 %v473, 24
        %v672 = vpop.permute.xlu0 %671
        %673 = vrot.lane.b32.xlu0 %v474, 24
        %v674 = vpop.permute.xlu0 %673
        %675 = vrot.lane.b32.xlu0 %v475, 24
        %v676 = vpop.permute.xlu0 %675
        %693 = vrot.lane.b32.xlu0 %v477, 28
        %v694 = vpop.permute.xlu0 %693
        %695 = vrot.lane.b32.xlu0 %v478, 28
        %v696 = vpop.permute.xlu0 %695
        %697 = vrot.lane.b32.xlu0 %v479, 28
        %v698 = vpop.permute.xlu0 %697
        %699 = vrot.lane.b32.xlu0 %v480, 28
        %v700 = vpop.permute.xlu0 %699
        %701 = vrot.lane.b32.xlu0 %v481, 28
        %v702 = vpop.permute.xlu0 %701
        %703 = vrot.lane.b32.xlu0 %v482, 28
        %v704 = vpop.permute.xlu0 %703
        %705 = vrot.lane.b32.xlu0 %v483, 28
        %v706 = vpop.permute.xlu0 %705
        %707 = vrot.lane.b32.xlu0 %v484, 28
        %v708 = vpop.permute.xlu0 %707
        %725 = vrot.lane.b32.xlu0 %v485, 32
        %v726 = vpop.permute.xlu0 %725
        %727 = vrot.lane.b32.xlu0 %v486, 32
        %v728 = vpop.permute.xlu0 %727
        %729 = vrot.lane.b32.xlu0 %v487, 32
        %v730 = vpop.permute.xlu0 %729
        %731 = vrot.lane.b32.xlu0 %v488, 32
        %v732 = vpop.permute.xlu0 %731
        %733 = vrot.lane.b32.xlu0 %v489, 32
        %v734 = vpop.permute.xlu0 %733
        %735 = vrot.lane.b32.xlu0 %v490, 32
        %v736 = vpop.permute.xlu0 %735
        %737 = vrot.lane.b32.xlu0 %v491, 32
        %v738 = vpop.permute.xlu0 %737
        %739 = vrot.lane.b32.xlu0 %v492, 32
        %v740 = vpop.permute.xlu0 %739
        %vm749 = vcmask 31744
        %v750 = vsel %vm749, %v419, %v502
        %v751 = vsel %vm749, %v420, %v504
        %v752 = vsel %vm749, %v421, %v506
        %v753 = vsel %vm749, %v422, %v508
        %v754 = vsel %vm749, %v423, %v510
        %v755 = vsel %vm749, %v424, %v512
        %v756 = vsel %vm749, %v425, %v514
        %v757 = vsel %vm749, %v426, %v516
        %vm758 = vcmask 64512
        %v759 = vsel %vm758, %v750, %v534
        %v760 = vsel %vm758, %v751, %v536
        %v761 = vsel %vm758, %v752, %v538
        %v762 = vsel %vm758, %v753, %v540
        %v763 = vsel %vm758, %v754, %v542
        %v764 = vsel %vm758, %v755, %v544
        %v765 = vsel %vm758, %v756, %v546
        %v766 = vsel %vm758, %v757, %v548
        %vm767 = vcmask 97280
        %v768 = vsel %vm767, %v759, %v566
        %v769 = vsel %vm767, %v760, %v568
        %v770 = vsel %vm767, %v761, %v570
        %v771 = vsel %vm767, %v762, %v572
        %v772 = vsel %vm767, %v763, %v574
        %v773 = vsel %vm767, %v764, %v576
        %v774 = vsel %vm767, %v765, %v578
        %v775 = vsel %vm767, %v766, %v580
        %vm776 = vcmask 130048
        %v777 = vsel %vm776, %v768, %v598
        %v778 = vsel %vm776, %v769, %v600
        %v779 = vsel %vm776, %v770, %v602
        %v780 = vsel %vm776, %v771, %v604
        %v781 = vsel %vm776, %v772, %v606
        %v782 = vsel %vm776, %v773, %v608
        %v783 = vsel %vm776, %v774, %v610
        %v784 = vsel %vm776, %v775, %v612
        %vm785 = vcmask 162816
        %v786 = vsel %vm785, %v777, %v630
        %v787 = vsel %vm785, %v778, %v632
        %v788 = vsel %vm785, %v779, %v634
        %v789 = vsel %vm785, %v780, %v636
        %v790 = vsel %vm785, %v781, %v638
        %v791 = vsel %vm785, %v782, %v640
        %v792 = vsel %vm785, %v783, %v642
        %v793 = vsel %vm785, %v784, %v644
        %vm794 = vcmask 195584
        %v795 = vsel %vm794, %v786, %v662
        %v796 = vsel %vm794, %v787, %v664
        %v797 = vsel %vm794, %v788, %v666
        %v798 = vsel %vm794, %v789, %v668
        %v799 = vsel %vm794, %v790, %v670
        %v800 = vsel %vm794, %v791, %v672
        %v801 = vsel %vm794, %v792, %v674
        %v802 = vsel %vm794, %v793, %v676
        %vm803 = vcmask 228352
        %v804 = vsel %vm803, %v795, %v694
        %v805 = vsel %vm803, %v796, %v696
        %v806 = vsel %vm803, %v797, %v698
        %v807 = vsel %vm803, %v798, %v700
        %v808 = vsel %vm803, %v799, %v702
        %v809 = vsel %vm803, %v800, %v704
        %v810 = vsel %vm803, %v801, %v706
        %v811 = vsel %vm803, %v802, %v708
        %vm812 = vcmask 261120
        %v813 = vsel %vm812, %v804, %v726
        %v814 = vsel %vm812, %v805, %v728
        %v815 = vsel %vm812, %v806, %v730
        %v816 = vsel %vm812, %v807, %v732
        %v817 = vsel %vm812, %v808, %v734
        %v818 = vsel %vm812, %v809, %v736
        %v819 = vsel %vm812, %v810, %v738
        %v820 = vsel %vm812, %v811, %v740
        %v821 = vpack.c.bf16 %v814, %v813
        %v822 = vpack.c.bf16 %v816, %v815
        %v823 = vpack.c.bf16 %v818, %v817
        %v824 = vpack.c.bf16 %v820, %v819
        %v825 = vld [vmem:[%s4] sm:$0xf]
        %v826 = vld [vmem:[%s4 + $0x4] sm:$0xf]
        %v827 = vld [vmem:[%s4 + $0x8] sm:$0xf]
        %v828 = vld [vmem:[%s4 + $0xc] sm:$0xf]
        %v829 = vld [vmem:[%s4 + $0x10] sm:$0x3]
        %v835 = vunpack.c.l.b16 %v825
        %v836 = vunpack.c.l.b16 %v826
        %v837 = vunpack.c.l.b16 %v827
        %v838 = vunpack.c.l.b16 %v828
        %v839 = vunpack.c.l.b16 %v829
        %v840 = vpack.c.b16 %v836, %v835
        %v841 = vpack.c.b16 %v838, %v837
        %v842 = vpack.c.b16 %v839, %v839
        %vm845 = vcmask 293888
        %v847 = vsel %vm845, %v821, 0
        %v850 = vsel %vm845, %v822, 0
        %v853 = vsel %vm845, %v823, 0
        %v856 = vsel %vm845, %v824, 0
        %vm858 = vcmask 1041408
        %v860 = vsel %vm858, %v842, 0
        %862 = vmatprep.subr.bf16.mxu0 0
        %863 = vmatpush1.bf16.msra.mxu0 %v840
        %864 = vmatprep.subr.bf16.mxu0 0
        %865 = vmatpush1.bf16.msra.mxu0 %v841
        %866 = vmatprep.subr.bf16.mxu0 0
        %867 = vmatpush1.bf16.msra.mxu0 %v860
        %868 = vmatprep.subr.bf16.mxu0 0
        %869 = vmatpush1.bf16.msra.mxu0 0
        %870 = vmatprep.subr.bf16.mxu0 0
        %871 = vmatpush1.bf16.msra.mxu0 0
        %872 = vmatprep.subr.bf16.mxu0 0
        %873 = vmatpush1.bf16.msra.mxu0 0
        %874 = vmatprep.subr.bf16.mxu0 0
        %875 = vmatpush1.bf16.msra.mxu0 0
        %876 = vmatprep.subr.bf16.mxu0 0
        %877 = vmatpush1.bf16.msra.mxu0 0
        %878 = vmatprep.subr.bf16.mxu0 0
        %879 = vmatpush1.bf16.msra.mxu0 0
        %880 = vmatprep.subr.bf16.mxu0 0
        %881 = vmatpush1.bf16.msra.mxu0 0
        %882 = vmatprep.subr.bf16.mxu0 0
        %883 = vmatpush1.bf16.msra.mxu0 0
        %884 = vmatprep.subr.bf16.mxu0 0
        %885 = vmatpush1.bf16.msra.mxu0 0
        %886 = vmatprep.subr.bf16.mxu0 0
        %887 = vmatpush1.bf16.msra.mxu0 0
        %888 = vmatprep.subr.bf16.mxu0 0
        %889 = vmatpush1.bf16.msra.mxu0 0
        %890 = vmatprep.subr.bf16.mxu0 0
        %891 = vmatpush1.bf16.msra.mxu0 0
        %892 = vmatprep.subr.bf16.mxu0 0
        %893 = vmatpush1.bf16.msra.mxu0 0
        %894 = vmatprep.mubr.bf16.mxu0 0
        %895 = vmatmul.mubr.bf16.gmra.mrb[0].mxu0 %v847
        %v896 = vpop.f32.mrb[0].mxu0
        %v897 = vadd.f32 0.0, %v896
        %v898 = vpop.f32.mrb[0].mxu0
        %v899 = vpop.f32.mrb[0].mxu0
        %v900 = vadd.f32 0.0, %v899
        %v901 = vpop.f32.mrb[0].mxu0
        %902 = vmatprep.mubr.bf16.mxu0 0
        %903 = vmatmul.mubr.bf16.gmra.mrb[0].mxu0 %v850
        %v904 = vpop.f32.mrb[0].mxu0
        %v905 = vadd.f32 0.0, %v904
        %v906 = vpop.f32.mrb[0].mxu0
        %v907 = vpop.f32.mrb[0].mxu0
        %v908 = vadd.f32 0.0, %v907
        %v909 = vpop.f32.mrb[0].mxu0
        %910 = vmatprep.mubr.bf16.mxu0 0
        %911 = vmatmul.mubr.bf16.gmra.mrb[0].mxu0 %v853
        %v912 = vpop.f32.mrb[0].mxu0
        %v913 = vadd.f32 0.0, %v912
        %v914 = vpop.f32.mrb[0].mxu0
        %v915 = vpop.f32.mrb[0].mxu0
        %v916 = vadd.f32 0.0, %v915
        %v917 = vpop.f32.mrb[0].mxu0
        %918 = vmatprep.mubr.bf16.mxu0 0
        %919 = vmatmul.mubr.bf16.gmra.mrb[0].mxu0 %v856
        %v920 = vpop.f32.mrb[0].mxu0
        %v921 = vadd.f32 0.0, %v920
        %v922 = vpop.f32.mrb[0].mxu0
        %v923 = vpop.f32.mrb[0].mxu0
        %v924 = vadd.f32 0.0, %v923
        %v925 = vpop.f32.mrb[0].mxu0
        %926 = vdwg.mxu0
        %v927 = vld [vmem:[%s5] sm:$0x1]
        %v929 = vlaneseq
        %v930 = vshrl.u32 %v929, 7
        %v931 = vsub.s32 0, %v930
        %v932 = vrot.slane %v927, %v931
        %v934 = vmul.f32 %v897, %v932
        %v935 = vmul.f32 %v900, %v932
        %v936 = vmul.f32 %v905, %v932
        %v937 = vmul.f32 %v908, %v932
        %v938 = vmul.f32 %v913, %v932
        %v939 = vmul.f32 %v916, %v932
        %v940 = vmul.f32 %v921, %v932
        %v941 = vmul.f32 %v924, %v932
        %v942 = vld [vmem:[%s6] sm:$0x1]
        %v944 = vlaneseq
        %v945 = vshrl.u32 %v944, 7
        %v946 = vsub.s32 0, %v945
        %v947 = vrot.slane %v942, %v946
        %v949 = vadd.f32 %v934, %v947
        %v950 = vadd.f32 %v935, %v947
        %v951 = vadd.f32 %v936, %v947
        %v952 = vadd.f32 %v937, %v947
        %v953 = vadd.f32 %v938, %v947
        %v954 = vadd.f32 %v939, %v947
        %v955 = vadd.f32 %v940, %v947
        %v956 = vadd.f32 %v941, %v947
        %v957 = vmax.f32 %v949, 0.0
        %v958 = vmax.f32 %v950, 0.0
        %v959 = vmax.f32 %v951, 0.0
        %v960 = vmax.f32 %v952, 0.0
        %v961 = vmax.f32 %v953, 0.0
        %v962 = vmax.f32 %v954, 0.0
        %v963 = vmax.f32 %v955, 0.0
        %v964 = vmax.f32 %v956, 0.0
        %965 = vst.msk [vmem:[#allocation2] sm:$0xff] %vm758, 0.0
        %vm966 = vcmask 58368
        %967 = vst.msk [vmem:[#allocation2 + $0x8] sm:$0x3] %vm966, 0.0
        %968 = vst.msk [vmem:[#allocation2 + $0x10] sm:$0xff] %vm758, 0.0
        %969 = vst.msk [vmem:[#allocation2 + $0x18] sm:$0x3] %vm966, 0.0
        %970 = vst.msk [vmem:[#allocation2 + $0x20] sm:$0xff] %vm758, 0.0
        %971 = vst.msk [vmem:[#allocation2 + $0x28] sm:$0x3] %vm966, 0.0
        %972 = vst.msk [vmem:[#allocation2 + $0x30] sm:$0xff] %vm758, 0.0
        %973 = vst.msk [vmem:[#allocation2 + $0x38] sm:$0x3] %vm966, 0.0
        %974 = vst.msk [vmem:[#allocation2 + $0x40] sm:$0xff] %vm758, 0.0
        %975 = vst.msk [vmem:[#allocation2 + $0x48] sm:$0x3] %vm966, 0.0
        %976 = vst.msk [vmem:[#allocation2 + $0x50] sm:$0xff] %vm758, 0.0
        %977 = vst.msk [vmem:[#allocation2 + $0x58] sm:$0x3] %vm966, 0.0
        %978 = vst.msk [vmem:[#allocation2 + $0x60] sm:$0xff] %vm758, 0.0
        %979 = vst.msk [vmem:[#allocation2 + $0x68] sm:$0x3] %vm966, 0.0
        %980 = vst.msk [vmem:[#allocation2 + $0x70] sm:$0xff] %vm758, 0.0
        %981 = vst.msk [vmem:[#allocation2 + $0x78] sm:$0x3] %vm966, 0.0
        %982 = vst.msk [vmem:[#allocation2 + $0x80] sm:$0xff] %vm758, 0.0
        %983 = vst.msk [vmem:[#allocation2 + $0x88] sm:$0x3] %vm966, 0.0
        %984 = vst.msk [vmem:[#allocation2 + $0x90] sm:$0xff] %vm758, 0.0
        %985 = vst.msk [vmem:[#allocation2 + $0x98] sm:$0x3] %vm966, 0.0
        %s986 = scalar_lea.vmem [#allocation2], 16
        %987 = vst.msk [vmem:[%s986 + $0x1] sm:$0xff] %vm758, %v957
        %988 = vst.msk [vmem:[%s986 + $0x11] sm:$0xff] %vm758, %v958
        %989 = vst.msk [vmem:[%s986 + $0x21] sm:$0xff] %vm758, %v959
        %990 = vst.msk [vmem:[%s986 + $0x31] sm:$0xff] %vm758, %v960
        %991 = vst.msk [vmem:[%s986 + $0x41] sm:$0xff] %vm758, %v961
        %992 = vst.msk [vmem:[%s986 + $0x51] sm:$0xff] %vm758, %v962
        %993 = vst.msk [vmem:[%s986 + $0x61] sm:$0xff] %vm758, %v963
        %994 = vst.msk [vmem:[%s986 + $0x71] sm:$0xff] %vm758, %v964
        %v995 = vld [vmem:[#allocation2] sm:$0xff]
        %v996 = vld [vmem:[#allocation2 + $0x10] sm:$0xff]
        %v997 = vld [vmem:[#allocation2 + $0x20] sm:$0xff]
        %v998 = vld [vmem:[#allocation2 + $0x30] sm:$0xff]
        %v999 = vld [vmem:[#allocation2 + $0x40] sm:$0xff]
        %v1000 = vld [vmem:[#allocation2 + $0x50] sm:$0xff]
        %v1001 = vld [vmem:[#allocation2 + $0x60] sm:$0xff]
        %v1002 = vld [vmem:[#allocation2 + $0x70] sm:$0xff]
        %v1003 = vld [vmem:[#allocation2 + $0x1] sm:$0xff]
        %v1004 = vld [vmem:[#allocation2 + $0x11] sm:$0xff]
        %v1005 = vld [vmem:[#allocation2 + $0x21] sm:$0xff]
        %v1006 = vld [vmem:[#allocation2 + $0x31] sm:$0xff]
        %v1007 = vld [vmem:[#allocation2 + $0x41] sm:$0xff]
        %v1008 = vld [vmem:[#allocation2 + $0x51] sm:$0xff]
        %v1009 = vld [vmem:[#allocation2 + $0x61] sm:$0xff]
        %v1010 = vld [vmem:[#allocation2 + $0x71] sm:$0xff]
        %v1011 = vld [vmem:[#allocation2 + $0x2] sm:$0xff]
        %v1012 = vld [vmem:[#allocation2 + $0x12] sm:$0xff]
        %v1013 = vld [vmem:[#allocation2 + $0x22] sm:$0xff]
        %v1014 = vld [vmem:[#allocation2 + $0x32] sm:$0xff]
        %v1015 = vld [vmem:[#allocation2 + $0x42] sm:$0xff]
        %v1016 = vld [vmem:[#allocation2 + $0x52] sm:$0xff]
        %v1017 = vld [vmem:[#allocation2 + $0x62] sm:$0xff]
        %v1018 = vld [vmem:[#allocation2 + $0x72] sm:$0xff]
        %v1019 = vld [vmem:[%s986] sm:$0xff]
        %v1020 = vld [vmem:[%s986 + $0x10] sm:$0xff]
        %v1021 = vld [vmem:[%s986 + $0x20] sm:$0xff]
        %v1022 = vld [vmem:[%s986 + $0x30] sm:$0xff]
        %v1023 = vld [vmem:[%s986 + $0x40] sm:$0xff]
        %v1024 = vld [vmem:[%s986 + $0x50] sm:$0xff]
        %v1025 = vld [vmem:[%s986 + $0x60] sm:$0xff]
        %v1026 = vld [vmem:[%s986 + $0x70] sm:$0xff]
        %v1027 = vld [vmem:[%s986 + $0x1] sm:$0xff]
        %v1028 = vld [vmem:[%s986 + $0x11] sm:$0xff]
        %v1029 = vld [vmem:[%s986 + $0x21] sm:$0xff]
        %v1030 = vld [vmem:[%s986 + $0x31] sm:$0xff]
        %v1031 = vld [vmem:[%s986 + $0x41] sm:$0xff]
        %v1032 = vld [vmem:[%s986 + $0x51] sm:$0xff]
        %v1033 = vld [vmem:[%s986 + $0x61] sm:$0xff]
        %v1034 = vld [vmem:[%s986 + $0x71] sm:$0xff]
        %v1035 = vld [vmem:[%s986 + $0x2] sm:$0xff]
        %v1036 = vld [vmem:[%s986 + $0x12] sm:$0xff]
        %v1037 = vld [vmem:[%s986 + $0x22] sm:$0xff]
        %v1038 = vld [vmem:[%s986 + $0x32] sm:$0xff]
        %v1039 = vld [vmem:[%s986 + $0x42] sm:$0xff]
        %v1040 = vld [vmem:[%s986 + $0x52] sm:$0xff]
        %v1041 = vld [vmem:[%s986 + $0x62] sm:$0xff]
        %v1042 = vld [vmem:[%s986 + $0x72] sm:$0xff]
        %s1043 = scalar_lea.vmem [#allocation2], 32
        %v1044 = vld [vmem:[%s1043] sm:$0xff]
        %v1045 = vld [vmem:[%s1043 + $0x10] sm:$0xff]
        %v1046 = vld [vmem:[%s1043 + $0x20] sm:$0xff]
        %v1047 = vld [vmem:[%s1043 + $0x30] sm:$0xff]
        %v1048 = vld [vmem:[%s1043 + $0x40] sm:$0xff]
        %v1049 = vld [vmem:[%s1043 + $0x50] sm:$0xff]
        %v1050 = vld [vmem:[%s1043 + $0x60] sm:$0xff]
        %v1051 = vld [vmem:[%s1043 + $0x70] sm:$0xff]
        %v1052 = vld [vmem:[%s1043 + $0x1] sm:$0xff]
        %v1053 = vld [vmem:[%s1043 + $0x11] sm:$0xff]
        %v1054 = vld [vmem:[%s1043 + $0x21] sm:$0xff]
        %v1055 = vld [vmem:[%s1043 + $0x31] sm:$0xff]
        %v1056 = vld [vmem:[%s1043 + $0x41] sm:$0xff]
        %v1057 = vld [vmem:[%s1043 + $0x51] sm:$0xff]
        %v1058 = vld [vmem:[%s1043 + $0x61] sm:$0xff]
        %v1059 = vld [vmem:[%s1043 + $0x71] sm:$0xff]
        %v1060 = vld [vmem:[%s1043 + $0x2] sm:$0xff]
        %v1061 = vld [vmem:[%s1043 + $0x12] sm:$0xff]
        %v1062 = vld [vmem:[%s1043 + $0x22] sm:$0xff]
        %v1063 = vld [vmem:[%s1043 + $0x32] sm:$0xff]
        %v1064 = vld [vmem:[%s1043 + $0x42] sm:$0xff]
        %v1065 = vld [vmem:[%s1043 + $0x52] sm:$0xff]
        %v1066 = vld [vmem:[%s1043 + $0x62] sm:$0xff]
        %v1067 = vld [vmem:[%s1043 + $0x72] sm:$0xff]
        %1076 = vrot.lane.b32.xlu0 %v1003, 8
        %v1077 = vpop.permute.xlu0 %1076
        %1078 = vrot.lane.b32.xlu0 %v1004, 8
        %v1079 = vpop.permute.xlu0 %1078
        %1080 = vrot.lane.b32.xlu0 %v1005, 8
        %v1081 = vpop.permute.xlu0 %1080
        %1082 = vrot.lane.b32.xlu0 %v1006, 8
        %v1083 = vpop.permute.xlu0 %1082
        %1084 = vrot.lane.b32.xlu0 %v1007, 8
        %v1085 = vpop.permute.xlu0 %1084
        %1086 = vrot.lane.b32.xlu0 %v1008, 8
        %v1087 = vpop.permute.xlu0 %1086
        %1088 = vrot.lane.b32.xlu0 %v1009, 8
        %v1089 = vpop.permute.xlu0 %1088
        %1090 = vrot.lane.b32.xlu0 %v1010, 8
        %v1091 = vpop.permute.xlu0 %1090
        %1108 = vrot.lane.b32.xlu0 %v1011, 16
        %v1109 = vpop.permute.xlu0 %1108
        %1110 = vrot.lane.b32.xlu0 %v1012, 16
        %v1111 = vpop.permute.xlu0 %1110
        %1112 = vrot.lane.b32.xlu0 %v1013, 16
        %v1113 = vpop.permute.xlu0 %1112
        %1114 = vrot.lane.b32.xlu0 %v1014, 16
        %v1115 = vpop.permute.xlu0 %1114
        %1116 = vrot.lane.b32.xlu0 %v1015, 16
        %v1117 = vpop.permute.xlu0 %1116
        %1118 = vrot.lane.b32.xlu0 %v1016, 16
        %v1119 = vpop.permute.xlu0 %1118
        %1120 = vrot.lane.b32.xlu0 %v1017, 16
        %v1121 = vpop.permute.xlu0 %1120
        %1122 = vrot.lane.b32.xlu0 %v1018, 16
        %v1123 = vpop.permute.xlu0 %1122
        %1140 = vrot.lane.b32.xlu0 %v1019, 24
        %v1141 = vpop.permute.xlu0 %1140
        %1142 = vrot.lane.b32.xlu0 %v1020, 24
        %v1143 = vpop.permute.xlu0 %1142
        %1144 = vrot.lane.b32.xlu0 %v1021, 24
        %v1145 = vpop.permute.xlu0 %1144
        %1146 = vrot.lane.b32.xlu0 %v1022, 24
        %v1147 = vpop.permute.xlu0 %1146
        %1148 = vrot.lane.b32.xlu0 %v1023, 24
        %v1149 = vpop.permute.xlu0 %1148
        %1150 = vrot.lane.b32.xlu0 %v1024, 24
        %v1151 = vpop.permute.xlu0 %1150
        %1152 = vrot.lane.b32.xlu0 %v1025, 24
        %v1153 = vpop.permute.xlu0 %1152
        %1154 = vrot.lane.b32.xlu0 %v1026, 24
        %v1155 = vpop.permute.xlu0 %1154
        %1172 = vrot.lane.b32.xlu0 %v1027, 32
        %v1173 = vpop.permute.xlu0 %1172
        %1174 = vrot.lane.b32.xlu0 %v1028, 32
        %v1175 = vpop.permute.xlu0 %1174
        %1176 = vrot.lane.b32.xlu0 %v1029, 32
        %v1177 = vpop.permute.xlu0 %1176
        %1178 = vrot.lane.b32.xlu0 %v1030, 32
        %v1179 = vpop.permute.xlu0 %1178
        %1180 = vrot.lane.b32.xlu0 %v1031, 32
        %v1181 = vpop.permute.xlu0 %1180
        %1182 = vrot.lane.b32.xlu0 %v1032, 32
        %v1183 = vpop.permute.xlu0 %1182
        %1184 = vrot.lane.b32.xlu0 %v1033, 32
        %v1185 = vpop.permute.xlu0 %1184
        %1186 = vrot.lane.b32.xlu0 %v1034, 32
        %v1187 = vpop.permute.xlu0 %1186
        %1204 = vrot.lane.b32.xlu0 %v1035, 40
        %v1205 = vpop.permute.xlu0 %1204
        %1206 = vrot.lane.b32.xlu0 %v1036, 40
        %v1207 = vpop.permute.xlu0 %1206
        %1208 = vrot.lane.b32.xlu0 %v1037, 40
        %v1209 = vpop.permute.xlu0 %1208
        %1210 = vrot.lane.b32.xlu0 %v1038, 40
        %v1211 = vpop.permute.xlu0 %1210
        %1212 = vrot.lane.b32.xlu0 %v1039, 40
        %v1213 = vpop.permute.xlu0 %1212
        %1214 = vrot.lane.b32.xlu0 %v1040, 40
        %v1215 = vpop.permute.xlu0 %1214
        %1216 = vrot.lane.b32.xlu0 %v1041, 40
        %v1217 = vpop.permute.xlu0 %1216
        %1218 = vrot.lane.b32.xlu0 %v1042, 40
        %v1219 = vpop.permute.xlu0 %1218
        %1236 = vrot.lane.b32.xlu0 %v1044, 48
        %v1237 = vpop.permute.xlu0 %1236
        %1238 = vrot.lane.b32.xlu0 %v1045, 48
        %v1239 = vpop.permute.xlu0 %1238
        %1240 = vrot.lane.b32.xlu0 %v1046, 48
        %v1241 = vpop.permute.xlu0 %1240
        %1242 = vrot.lane.b32.xlu0 %v1047, 48
        %v1243 = vpop.permute.xlu0 %1242
        %1244 = vrot.lane.b32.xlu0 %v1048, 48
        %v1245 = vpop.permute.xlu0 %1244
        %1246 = vrot.lane.b32.xlu0 %v1049, 48
        %v1247 = vpop.permute.xlu0 %1246
        %1248 = vrot.lane.b32.xlu0 %v1050, 48
        %v1249 = vpop.permute.xlu0 %1248
        %1250 = vrot.lane.b32.xlu0 %v1051, 48
        %v1251 = vpop.permute.xlu0 %1250
        %1268 = vrot.lane.b32.xlu0 %v1052, 56
        %v1269 = vpop.permute.xlu0 %1268
        %1270 = vrot.lane.b32.xlu0 %v1053, 56
        %v1271 = vpop.permute.xlu0 %1270
        %1272 = vrot.lane.b32.xlu0 %v1054, 56
        %v1273 = vpop.permute.xlu0 %1272
        %1274 = vrot.lane.b32.xlu0 %v1055, 56
        %v1275 = vpop.permute.xlu0 %1274
        %1276 = vrot.lane.b32.xlu0 %v1056, 56
        %v1277 = vpop.permute.xlu0 %1276
        %1278 = vrot.lane.b32.xlu0 %v1057, 56
        %v1279 = vpop.permute.xlu0 %1278
        %1280 = vrot.lane.b32.xlu0 %v1058, 56
        %v1281 = vpop.permute.xlu0 %1280
        %1282 = vrot.lane.b32.xlu0 %v1059, 56
        %v1283 = vpop.permute.xlu0 %1282
        %1300 = vrot.lane.b32.xlu0 %v1060, 64
        %v1301 = vpop.permute.xlu0 %1300
        %1302 = vrot.lane.b32.xlu0 %v1061, 64
        %v1303 = vpop.permute.xlu0 %1302
        %1304 = vrot.lane.b32.xlu0 %v1062, 64
        %v1305 = vpop.permute.xlu0 %1304
        %1306 = vrot.lane.b32.xlu0 %v1063, 64
        %v1307 = vpop.permute.xlu0 %1306
        %1308 = vrot.lane.b32.xlu0 %v1064, 64
        %v1309 = vpop.permute.xlu0 %1308
        %1310 = vrot.lane.b32.xlu0 %v1065, 64
        %v1311 = vpop.permute.xlu0 %1310
        %1312 = vrot.lane.b32.xlu0 %v1066, 64
        %v1313 = vpop.permute.xlu0 %1312
        %1314 = vrot.lane.b32.xlu0 %v1067, 64
        %v1315 = vpop.permute.xlu0 %1314
        %v1324 = vsel %vm758, %v995, %v1077
        %v1325 = vsel %vm758, %v996, %v1079
        %v1326 = vsel %vm758, %v997, %v1081
        %v1327 = vsel %vm758, %v998, %v1083
        %v1328 = vsel %vm758, %v999, %v1085
        %v1329 = vsel %vm758, %v1000, %v1087
        %v1330 = vsel %vm758, %v1001, %v1089
        %v1331 = vsel %vm758, %v1002, %v1091
        %v1332 = vsel %vm776, %v1324, %v1109
        %v1333 = vsel %vm776, %v1325, %v1111
        %v1334 = vsel %vm776, %v1326, %v1113
        %v1335 = vsel %vm776, %v1327, %v1115
        %v1336 = vsel %vm776, %v1328, %v1117
        %v1337 = vsel %vm776, %v1329, %v1119
        %v1338 = vsel %vm776, %v1330, %v1121
        %v1339 = vsel %vm776, %v1331, %v1123
        %v1340 = vsel %vm794, %v1332, %v1141
        %v1341 = vsel %vm794, %v1333, %v1143
        %v1342 = vsel %vm794, %v1334, %v1145
        %v1343 = vsel %vm794, %v1335, %v1147
        %v1344 = vsel %vm794, %v1336, %v1149
        %v1345 = vsel %vm794, %v1337, %v1151
        %v1346 = vsel %vm794, %v1338, %v1153
        %v1347 = vsel %vm794, %v1339, %v1155
        %v1348 = vsel %vm812, %v1340, %v1173
        %v1349 = vsel %vm812, %v1341, %v1175
        %v1350 = vsel %vm812, %v1342, %v1177
        %v1351 = vsel %vm812, %v1343, %v1179
        %v1352 = vsel %vm812, %v1344, %v1181
        %v1353 = vsel %vm812, %v1345, %v1183
        %v1354 = vsel %vm812, %v1346, %v1185
        %v1355 = vsel %vm812, %v1347, %v1187
        %vm1356 = vcmask 326656
        %v1357 = vsel %vm1356, %v1348, %v1205
        %v1358 = vsel %vm1356, %v1349, %v1207
        %v1359 = vsel %vm1356, %v1350, %v1209
        %v1360 = vsel %vm1356, %v1351, %v1211
        %v1361 = vsel %vm1356, %v1352, %v1213
        %v1362 = vsel %vm1356, %v1353, %v1215
        %v1363 = vsel %vm1356, %v1354, %v1217
        %v1364 = vsel %vm1356, %v1355, %v1219
        %vm1365 = vcmask 392192
        %v1366 = vsel %vm1365, %v1357, %v1237
        %v1367 = vsel %vm1365, %v1358, %v1239
        %v1368 = vsel %vm1365, %v1359, %v1241
        %v1369 = vsel %vm1365, %v1360, %v1243
        %v1370 = vsel %vm1365, %v1361, %v1245
        %v1371 = vsel %vm1365, %v1362, %v1247
        %v1372 = vsel %vm1365, %v1363, %v1249
        %v1373 = vsel %vm1365, %v1364, %v1251
        %vm1374 = vcmask 457728
        %v1375 = vsel %vm1374, %v1366, %v1269
        %v1376 = vsel %vm1374, %v1367, %v1271
        %v1377 = vsel %vm1374, %v1368, %v1273
        %v1378 = vsel %vm1374, %v1369, %v1275
        %v1379 = vsel %vm1374, %v1370, %v1277
        %v1380 = vsel %vm1374, %v1371, %v1279
        %v1381 = vsel %vm1374, %v1372, %v1281
        %v1382 = vsel %vm1374, %v1373, %v1283
        %vm1383 = vcmask 523264
        %v1384 = vsel %vm1383, %v1375, %v1301
        %v1385 = vsel %vm1383, %v1376, %v1303
        %v1386 = vsel %vm1383, %v1377, %v1305
        %v1387 = vsel %vm1383, %v1378, %v1307
        %v1388 = vsel %vm1383, %v1379, %v1309
        %v1389 = vsel %vm1383, %v1380, %v1311
        %v1390 = vsel %vm1383, %v1381, %v1313
        %v1391 = vsel %vm1383, %v1382, %v1315
        %v1392 = vpack.c.bf16 %v1385, %v1384
        %v1393 = vpack.c.bf16 %v1387, %v1386
        %v1394 = vpack.c.bf16 %v1389, %v1388
        %v1395 = vpack.c.bf16 %v1391, %v1390
        %v1396 = vld [vmem:[%s7] sm:$0xf]
        %v1397 = vld [vmem:[%s7 + $0x4] sm:$0xf]
        %v1398 = vld [vmem:[%s7 + $0x8] sm:$0xf]
        %v1399 = vld [vmem:[%s7 + $0xc] sm:$0xf]
        %v1400 = vld [vmem:[%s7 + $0x10] sm:$0xf]
        %v1401 = vld [vmem:[%s7 + $0x14] sm:$0xf]
        %v1402 = vld [vmem:[%s7 + $0x18] sm:$0xf]
        %v1403 = vld [vmem:[%s7 + $0x1c] sm:$0xf]
        %v1404 = vld [vmem:[%s7 + $0x20] sm:$0xf]
        %v1414 = vunpack.c.l.b16 %v1396
        %v1415 = vunpack.c.l.b16 %v1397
        %v1416 = vunpack.c.l.b16 %v1398
        %v1417 = vunpack.c.l.b16 %v1399
        %v1418 = vunpack.c.l.b16 %v1400
        %v1419 = vunpack.c.l.b16 %v1401
        %v1420 = vunpack.c.l.b16 %v1402
        %v1421 = vunpack.c.l.b16 %v1403
        %v1422 = vunpack.c.l.b16 %v1404
        %v1423 = vpack.c.b16 %v1415, %v1414
        %v1424 = vpack.c.b16 %v1417, %v1416
        %v1425 = vpack.c.b16 %v1419, %v1418
        %v1426 = vpack.c.b16 %v1421, %v1420
        %v1427 = vpack.c.b16 %v1422, %v1422
        %vm1432 = vcmask 588800
        %v1434 = vsel %vm1432, %v1392, 0
        %v1437 = vsel %vm1432, %v1393, 0
        %v1440 = vsel %vm1432, %v1394, 0
        %v1443 = vsel %vm1432, %v1395, 0
        %vm1445 = vcmask 1043456
        %v1447 = vsel %vm1445, %v1427, 0
        %1449 = vmatprep.subr.bf16.mxu0 0
        %1450 = vmatpush1.bf16.msra.mxu0 %v1423
        %1451 = vmatprep.subr.bf16.mxu0 0
        %1452 = vmatpush1.bf16.msra.mxu0 %v1424
        %1453 = vmatprep.subr.bf16.mxu0 0
        %1454 = vmatpush1.bf16.msra.mxu0 %v1425
        %1455 = vmatprep.subr.bf16.mxu0 0
        %1456 = vmatpush1.bf16.msra.mxu0 %v1426
        %1457 = vmatprep.subr.bf16.mxu0 0
        %1458 = vmatpush1.bf16.msra.mxu0 %v1447
        %1459 = vmatprep.subr.bf16.mxu0 0
        %1460 = vmatpush1.bf16.msra.mxu0 0
        %1461 = vmatprep.subr.bf16.mxu0 0
        %1462 = vmatpush1.bf16.msra.mxu0 0
        %1463 = vmatprep.subr.bf16.mxu0 0
        %1464 = vmatpush1.bf16.msra.mxu0 0
        %1465 = vmatprep.subr.bf16.mxu0 0
        %1466 = vmatpush1.bf16.msra.mxu0 0
        %1467 = vmatprep.subr.bf16.mxu0 0
        %1468 = vmatpush1.bf16.msra.mxu0 0
        %1469 = vmatprep.subr.bf16.mxu0 0
        %1470 = vmatpush1.bf16.msra.mxu0 0
        %1471 = vmatprep.subr.bf16.mxu0 0
        %1472 = vmatpush1.bf16.msra.mxu0 0
        %1473 = vmatprep.subr.bf16.mxu0 0
        %1474 = vmatpush1.bf16.msra.mxu0 0
        %1475 = vmatprep.subr.bf16.mxu0 0
        %1476 = vmatpush1.bf16.msra.mxu0 0
        %1477 = vmatprep.subr.bf16.mxu0 0
        %1478 = vmatpush1.bf16.msra.mxu0 0
        %1479 = vmatprep.subr.bf16.mxu0 0
        %1480 = vmatpush1.bf16.msra.mxu0 0
        %1481 = vmatprep.mubr.bf16.mxu0 0
        %1482 = vmatmul.mubr.bf16.gmra.mrb[0].mxu0 %v1434
        %v1483 = vpop.f32.mrb[0].mxu0
        %v1484 = vadd.f32 0.0, %v1483
        %v1485 = vpop.f32.mrb[0].mxu0
        %v1486 = vpop.f32.mrb[0].mxu0
        %v1487 = vadd.f32 0.0, %v1486
        %v1488 = vpop.f32.mrb[0].mxu0
        %1489 = vmatprep.mubr.bf16.mxu0 0
        %1490 = vmatmul.mubr.bf16.gmra.mrb[0].mxu0 %v1437
        %v1491 = vpop.f32.mrb[0].mxu0
        %v1492 = vadd.f32 0.0, %v1491
        %v1493 = vpop.f32.mrb[0].mxu0
        %v1494 = vpop.f32.mrb[0].mxu0
        %v1495 = vadd.f32 0.0, %v1494
        %v1496 = vpop.f32.mrb[0].mxu0
        %1497 = vmatprep.mubr.bf16.mxu0 0
        %1498 = vmatmul.mubr.bf16.gmra.mrb[0].mxu0 %v1440
        %v1499 = vpop.f32.mrb[0].mxu0
        %v1500 = vadd.f32 0.0, %v1499
        %v1501 = vpop.f32.mrb[0].mxu0
        %v1502 = vpop.f32.mrb[0].mxu0
        %v1503 = vadd.f32 0.0, %v1502
        %v1504 = vpop.f32.mrb[0].mxu0
        %1505 = vmatprep.mubr.bf16.mxu0 0
        %1506 = vmatmul.mubr.bf16.gmra.mrb[0].mxu0 %v1443
        %v1507 = vpop.f32.mrb[0].mxu0
        %v1508 = vadd.f32 0.0, %v1507
        %v1509 = vpop.f32.mrb[0].mxu0
        %v1510 = vpop.f32.mrb[0].mxu0
        %v1511 = vadd.f32 0.0, %v1510
        %v1512 = vpop.f32.mrb[0].mxu0
        %1513 = vdwg.mxu0
        %v1514 = vld [vmem:[%s8] sm:$0x1]
        %v1516 = vlaneseq
        %v1517 = vshrl.u32 %v1516, 7
        %v1518 = vsub.s32 0, %v1517
        %v1519 = vrot.slane %v1514, %v1518
        %v1521 = vmul.f32 %v1484, %v1519
        %v1522 = vmul.f32 %v1487, %v1519
        %v1523 = vmul.f32 %v1492, %v1519
        %v1524 = vmul.f32 %v1495, %v1519
        %v1525 = vmul.f32 %v1500, %v1519
        %v1526 = vmul.f32 %v1503, %v1519
        %v1527 = vmul.f32 %v1508, %v1519
        %v1528 = vmul.f32 %v1511, %v1519
        %v1529 = vld [vmem:[%s9] sm:$0x1]
        %v1531 = vlaneseq
        %v1532 = vshrl.u32 %v1531, 7
        %v1533 = vsub.s32 0, %v1532
        %v1534 = vrot.slane %v1529, %v1533
        %v1536 = vadd.f32 %v1521, %v1534
        %v1537 = vadd.f32 %v1522, %v1534
        %v1538 = vadd.f32 %v1523, %v1534
        %v1539 = vadd.f32 %v1524, %v1534
        %v1540 = vadd.f32 %v1525, %v1534
        %v1541 = vadd.f32 %v1526, %v1534
        %v1542 = vadd.f32 %v1527, %v1534
        %v1543 = vadd.f32 %v1528, %v1534
        %v1544 = vld [vmem:[%s417] sm:$0xff]
        %v1545 = vld [vmem:[%s417 + $0x10] sm:$0xff]
        %v1546 = vld [vmem:[%s417 + $0x20] sm:$0xff]
        %v1547 = vld [vmem:[%s417 + $0x30] sm:$0xff]
        %v1548 = vld [vmem:[%s417 + $0x40] sm:$0xff]
        %v1549 = vld [vmem:[%s417 + $0x50] sm:$0xff]
        %v1550 = vld [vmem:[%s417 + $0x60] sm:$0xff]
        %v1551 = vld [vmem:[%s417 + $0x70] sm:$0xff]
        %1560 = vrot.lane.b32.xlu0 %v1544, 2
        %v1561 = vpop.permute.xlu0 %1560
        %1562 = vrot.lane.b32.xlu0 %v1545, 2
        %v1563 = vpop.permute.xlu0 %1562
        %1564 = vrot.lane.b32.xlu0 %v1546, 2
        %v1565 = vpop.permute.xlu0 %1564
        %1566 = vrot.lane.b32.xlu0 %v1547, 2
        %v1567 = vpop.permute.xlu0 %1566
        %1568 = vrot.lane.b32.xlu0 %v1548, 2
        %v1569 = vpop.permute.xlu0 %1568
        %1570 = vrot.lane.b32.xlu0 %v1549, 2
        %v1571 = vpop.permute.xlu0 %1570
        %1572 = vrot.lane.b32.xlu0 %v1550, 2
        %v1573 = vpop.permute.xlu0 %1572
        %1574 = vrot.lane.b32.xlu0 %v1551, 2
        %v1575 = vpop.permute.xlu0 %1574
        %vm1584 = vcmask 15360
        %v1585 = vsel %vm1584, 0.0, %v1561
        %v1586 = vsel %vm1584, 0.0, %v1563
        %v1587 = vsel %vm1584, 0.0, %v1565
        %v1588 = vsel %vm1584, 0.0, %v1567
        %v1589 = vsel %vm1584, 0.0, %v1569
        %v1590 = vsel %vm1584, 0.0, %v1571
        %v1591 = vsel %vm1584, 0.0, %v1573
        %v1592 = vsel %vm1584, 0.0, %v1575
        %vm1593 = vcmask 48128
        %v1594 = vsel %vm1593, %v1585, 0.0
        %v1595 = vsel %vm1593, %v1586, 0.0
        %v1596 = vsel %vm1593, %v1587, 0.0
        %v1597 = vsel %vm1593, %v1588, 0.0
        %v1598 = vsel %vm1593, %v1589, 0.0
        %v1599 = vsel %vm1593, %v1590, 0.0
        %v1600 = vsel %vm1593, %v1591, 0.0
        %v1601 = vsel %vm1593, %v1592, 0.0
        %v1602 = vadd.f32 %v1536, %v1594
        %v1603 = vadd.f32 %v1537, %v1595
        %v1604 = vadd.f32 %v1538, %v1596
        %v1605 = vadd.f32 %v1539, %v1597
        %v1606 = vadd.f32 %v1540, %v1598
        %v1607 = vadd.f32 %v1541, %v1599
        %v1608 = vadd.f32 %v1542, %v1600
        %v1609 = vadd.f32 %v1543, %v1601
        %v1610 = vmax.f32 %v1602, 0.0
        %v1611 = vmax.f32 %v1603, 0.0
        %v1612 = vmax.f32 %v1604, 0.0
        %v1613 = vmax.f32 %v1605, 0.0
        %v1614 = vmax.f32 %v1606, 0.0
        %v1615 = vmax.f32 %v1607, 0.0
        %v1616 = vmax.f32 %v1608, 0.0
        %v1617 = vmax.f32 %v1609, 0.0
        %1618 = vst.msk [vmem:[%s397] sm:$0xff] %vm758, %v1610
        %1619 = vst.msk [vmem:[%s397 + $0x8] sm:$0xff] %vm758, %v1611
        %1620 = vst.msk [vmem:[%s397 + $0x10] sm:$0xff] %vm758, %v1612
        %1621 = vst.msk [vmem:[%s397 + $0x18] sm:$0xff] %vm758, %v1613
        %1622 = vst.msk [vmem:[%s397 + $0x20] sm:$0xff] %vm758, %v1614
        %1623 = vst.msk [vmem:[%s397 + $0x28] sm:$0xff] %vm758, %v1615
        %1624 = vst.msk [vmem:[%s397 + $0x30] sm:$0xff] %vm758, %v1616
        %1625 = vst.msk [vmem:[%s397 + $0x38] sm:$0xff] %vm758, %v1617
        %s1626 = sand.u32 %s262, 1
        %s1627 = scalar_lea.sflag [#allocation4], %s1626
        %s1628 = sand.u32 %s262, 1
        %s1629 = smul.addr %s1628, 64
        %s1630 = scalar_lea.vmem [#allocation3], %s1629
        // Predicated region
        $region61: #{tpu_custom_call.1} parent=59 // pred_check
          %p1631 = pneg %p272
        $region62: #{tpu_custom_call.1} parent=59 // pred_check_branch
          %1633 = sbr.rel (%p1631) target = $region64
        $region63: #{tpu_custom_call.1} parent=59 // pred_region
          %s1635 = ssub.s32 1024, 1024
          %1636 = vsyncadd %s1627, %s1635
          %s1637 = smul.addr %s24, 8
          %s1638 = smul.addr %s1637, 128
          %s1639 = scalar_lea.hbm %s10, %s1638
          %s1640 = sshll.u32 %s1630, 4
          %s1641 = int_to_ptr.vmem [resolvable:$true] %s1640
          %1646 = dma.vmem_to_hbm [thread:$0]  %s1641, 1024, %s1639, %s1627, 128, 128, 8
        $region64: #{tpu_custom_call.1} parent=59 // pred_fallthru
          _
      $region60: #{tpu_custom_call.1} parent=5 // pred_fallthru
        _
      %p1647 = scmp.le.s32.totalorder 2, %s19
      // Predicated region
      $region65: #{tpu_custom_call.1} parent=5 // pred_check
        %p1648 = pneg %p1647
      $region66: #{tpu_custom_call.1} parent=5 // pred_check_branch
        %1650 = sbr.rel (%p1648) target = $region68
      $region67: #{tpu_custom_call.1} parent=5 // pred_region
        %s1651 = ssub.s32 %s19, 2
        // Predicated region
        $region69: #{tpu_custom_call.1} parent=67 // pred_check
          %p1652 = pneg %p278
        $region70: #{tpu_custom_call.1} parent=67 // pred_check_branch
          %1654 = sbr.rel (%p1652) target = $region72
        $region71: #{tpu_custom_call.1} parent=67 // pred_region
          %s1655 = sand.u32 %s263, 1
          %s1656 = scalar_lea.sflag [#allocation4], %s1655
          %s1657 = sand.u32 %s263, 1
          %s1658 = smul.addr %s1657, 64
          %s1659 = scalar_lea.vmem [#allocation3], %s1658
          %1660 = dma.done %s1656, 1024
        $region72: #{tpu_custom_call.1} parent=67 // pred_fallthru
          _
      $region68: #{tpu_custom_call.1} parent=5 // pred_fallthru
        _
    $region6: #{tpu_custom_call.1} parent=1 // loop_footer
      %s23 = sadd.s32 1, %s19
    $region7: #{tpu_custom_call.1} parent=1 // loop_footer_branch
      %18 = sbr.rel target = $region3
    $region8: #{tpu_custom_call.1} parent=1 // loop_exit
      _
    %1661 = vsyncpa [#allocation4], 1
    %s1662 = scalar_lea.sflag [#allocation4], 1
    %1663 = vsyncpa %s1662, 1

</llo_original>
